<compile_context>
chip_gen: v6e
topology: v6e:2x2x1
jax: 0.10.0
libtpu: 0.0.40
codegen_flags: <defaults>
</compile_context>

<pallas_src>
import functools

import jax
import jax.numpy as jnp
from jax.experimental import pallas as pl
from jax.experimental.pallas import tpu as pltpu


def _round_up(x, m):
    return (x + m - 1) // m * m


def _cdiv(a, b):
    return -(-a // b)


# ----------------------------------------------------------------------------
# Kernel: fused "same" 3x3 conv (bias-free) + per-channel PReLU on one row tile
# ----------------------------------------------------------------------------
def _conv_prelu_kernel(x_ref, top_ref, bot_ref, w_ref, a_ref, o_ref, slab_ref):
    """Ref order (per (batch, row-tile) grid step):
        x_ref    : (1, TH, Wp, Cp)      bf16  (W pre-padded to Wc+KW-1)
        top_ref  : (1, 1,  Wp, Cp)      bf16  row just above the tile (clamped)
        bot_ref  : (1, 1,  Wp, Cp)      bf16  row just below the tile (clamped)
        w_ref    : (KH*KW*Cp, Coutp)    bf16  taps, row index = (ky*KW+kx)*Cp + cin
        a_ref    : (1, Coutp)           f32   PReLU slopes (already repeated r^2x)
        o_ref    : (1, TH, Wc, Coutp)   bf16
        slab_ref : (TH*Wc, KH*KW*Cp)    bf16  im2col scratch (matmul lhs)
    """
    TH = x_ref.shape[1]
    Cp = x_ref.shape[3]
    Wc = o_ref.shape[2]
    Coutp = o_ref.shape[3]
    KW = x_ref.shape[2] - Wc + 1          # == 3
    KH = w_ref.shape[0] // (KW * Cp)      # == 3

    t = pl.program_id(1)

    # Halo rows (masked to zero at the image top / bottom => "same" zero pad).
    top = jnp.where(t > 0, top_ref[0, 0], jnp.zeros_like(top_ref[0, 0]))
    bot = jnp.where(t < pl.num_programs(1) - 1,
                    bot_ref[0, 0], jnp.zeros_like(bot_ref[0, 0]))

    # Build the im2col slab with static, lane-aligned stores: one store per
    # (ky, kx) tap (plus a tiny halo-row store for the first / last tap row).
    # Slab row index = h*Wc + w ; lane offset = (ky*KW + kx)*Cp.
    for ky in range(KH):
        for kx in range(KW):
            off = (ky * KW + kx) * Cp
            if ky == 0:                      # input row h-1: halo for h==0
                slab_ref[0:Wc, off:off + Cp] = top[kx:kx + Wc, :]
                slab_ref[Wc:TH * Wc, off:off + Cp] = (
                    x_ref[0, 0:TH - 1, kx:kx + Wc, :]
                    .reshape((TH - 1) * Wc, Cp))
            elif ky == KH - 1:               # input row h+1: halo for h==TH-1
                slab_ref[0:(TH - 1) * Wc, off:off + Cp] = (
                    x_ref[0, 1:TH, kx:kx + Wc, :]
                    .reshape((TH - 1) * Wc, Cp))
                slab_ref[(TH - 1) * Wc:TH * Wc, off:off + Cp] = bot[kx:kx + Wc, :]
            else:                            # input row h
                slab_ref[:, off:off + Cp] = (
                    x_ref[0, 0:TH, kx:kx + Wc, :].reshape(TH * Wc, Cp))

    # Single fused MXU matmul (K = KH*KW*Cp), f32 accumulation in the MXU path.
    y = jnp.dot(slab_ref[...], w_ref[...], preferred_element_type=jnp.float32)

    # Fused per-channel PReLU epilogue in f32; bf16 lane-dense store.
    alpha = a_ref[...]                        # (1, Coutp)
    y = jnp.where(y >= 0.0, y, y * alpha)
    o_ref[0] = y.reshape(TH, Wc, Coutp).astype(o_ref.dtype)


# ----------------------------------------------------------------------------
# Per-generation VMEM budgeting (tied together, with headroom for Mosaic temps)
# ----------------------------------------------------------------------------
def _vmem_budget():
    try:
        info = pltpu.get_tpu_info()
        cap = getattr(info, "vmem_capacity_bytes", None) or 64 * 1024 * 1024
    except Exception:  # conservative fallback (safe for v7x's 64 MiB)
        cap = 64 * 1024 * 1024
    limit = min(int(cap * 0.75), 110 * 1024 * 1024)   # vmem_limit_bytes
    budget = int(limit * 0.5)                          # working-set estimate cap
    return budget, limit


def _pick_tile_h(H, Wc, Cp, Coutp, KH, KW, budget_bytes):
    """Largest multiple-of-8 tile height whose estimated VMEM footprint fits."""
    Wp = Wc + KW - 1
    K = KH * KW * Cp
    best = 8
    for th in range(8, _round_up(max(H, 8), 8) + 1, 8):
        in_b = 2 * th * Wp * Cp * 2              # main tile, double-buffered
        halo_b = 2 * 2 * Wp * Cp * 2             # two 1-row halos
        w_b = 2 * K * Coutp * 2                  # resident weights (conservative x2)
        slab_b = th * Wc * K * 2                 # bf16 im2col scratch
        acc_b = th * Wc * Coutp * 4              # f32 matmul result / epilogue temp
        out_b = 2 * th * Wc * Coutp * 2          # bf16 output, double-buffered
        if in_b + halo_b + w_b + slab_b + acc_b + out_b <= budget_bytes:
            best = th
    return best


# ----------------------------------------------------------------------------
# Glue: PixelShuffle in NHWC (pure permutation — layout plumbing, plain JAX)
# ----------------------------------------------------------------------------
def _pixel_shuffle_nhwc(x, r):
    # torch.nn.PixelShuffle channel ordering: in-ch = c*r^2 + i*r + j.
    N, H, W, Cr2 = x.shape
    C = Cr2 // (r * r)
    x = x.reshape(N, H, W, C, r, r)
    x = jnp.transpose(x, (0, 1, 4, 2, 5, 3))
    return x.reshape(N, H * r, W * r, C)


# ----------------------------------------------------------------------------
# Public wrapper (PyTorch NCHW in/out)
# ----------------------------------------------------------------------------
def upsample_block(x_nchw, weight, alpha, scale_factor, *, tile_h=None):
    """UpsampleBlock forward.

    x_nchw : (N, Cin, H, W) float32
    weight : (Cin*r^2, Cin, 3, 3) float32   (torch Conv2d layout, bias-free)
    alpha  : (Cin,) float32                 (PReLU per-channel slopes)
    Returns (N, Cin, H*r, W*r) float32.
    """
    N, Cin, H, W = x_nchw.shape
    r = int(scale_factor)
    Cout, Cin_w, KH, KW = weight.shape
    assert Cin_w == Cin and Cout == Cin * r * r and (KH, KW) == (3, 3)

    Cp = _round_up(Cin, 128)        # lane-dense input channels (per tap)
    Coutp = _round_up(Cout, 128)    # lane-dense output channels
    Wc = _round_up(W, 8)            # compute width (mult. of 8 -> cheap reshapes)
    Wp = Wc + KW - 1                # padded width seen by the kernel
    K = KH * KW * Cp                # fused matmul contraction depth

    budget, vmem_limit = _vmem_budget()
    if tile_h is None:
        tile_h = _pick_tile_h(H, Wc, Cp, Coutp, KH, KW, budget)
        # Keep >= ~8 grid steps so both v7x TensorCores get a full pipeline.
        min_steps = 8
        if N * _cdiv(H, tile_h) < min_steps:
            cap = max(8, (H // _cdiv(min_steps, N)) // 8 * 8)
            tile_h = min(tile_h, cap)
    TH = max(8, min(_round_up(tile_h, 8), _round_up(H, 8)))
    H_pad = _round_up(H, TH)
    T = H_pad // TH
    pad_lo = (KW - 1) // 2

    # NCHW -> NHWC, bf16 activations; zero-pad H (to multiple of TH), W halo
    # (+ alignment), and the channel (lane) axis.
    x = jnp.transpose(x_nchw, (0, 2, 3, 1)).astype(jnp.bfloat16)
    xp = jnp.pad(x, ((0, 0), (0, H_pad - H),
                     (pad_lo, Wp - W - pad_lo), (0, Cp - Cin)))

    # (Cout, Cin, KH, KW) -> (KH*KW*Cp, Coutp); row index = (ky*KW+kx)*Cp + cin.
    w = jnp.transpose(weight, (2, 3, 1, 0))
    w = jnp.pad(w, ((0, 0), (0, 0), (0, Cp - Cin), (0, Coutp - Cout)))
    w = w.reshape(K, Coutp).astype(jnp.bfloat16)

    # PReLU(Cin) after PixelShuffle(r) == PReLU with alpha repeated r^2 times
    # applied before the shuffle (in-ch c*r^2 + k belongs to output channel c).
    a = jnp.repeat(alpha.astype(jnp.float32), r * r)
    a = jnp.pad(a, (0, Coutp - Cout)).reshape(1, Coutp)

    out = pl.pallas_call(
        _conv_prelu_kernel,
        grid=(N, T),
        in_specs=[
            # main row tile
            pl.BlockSpec((1, TH, Wp, Cp), lambda n, t: (n, t, 0, 0)),
            # 1-row halo above (clamped at the top edge, masked in-kernel)
            pl.BlockSpec((1, 1, Wp, Cp),
                         lambda n, t: (n, jnp.maximum(t * TH - 1, 0), 0, 0)),
            # 1-row halo below (clamped at the bottom edge, masked in-kernel)
            pl.BlockSpec((1, 1, Wp, Cp),
                         lambda n, t: (n, jnp.minimum((t + 1) * TH,
                                                      H_pad - 1), 0, 0)),
            # weights / PReLU slopes stay resident across the grid
            pl.BlockSpec((K, Coutp), lambda n, t: (0, 0)),
            pl.BlockSpec((1, Coutp), lambda n, t: (0, 0)),
        ],
        out_specs=pl.BlockSpec((1, TH, Wc, Coutp), lambda n, t: (n, t, 0, 0)),
        out_shape=jax.ShapeDtypeStruct((N, H_pad, Wc, Coutp), jnp.bfloat16),
        scratch_shapes=[pltpu.VMEM((TH * Wc, K), jnp.bfloat16)],
        compiler_params=pltpu.CompilerParams(
            dimension_semantics=("parallel", "parallel"),
            vmem_limit_bytes=vmem_limit),
    )(xp, xp, xp, w, a)

    y = out[:, :H, :W, :Cout]                  # drop row / col / lane padding
    y = _pixel_shuffle_nhwc(y, r)              # pure permutation (bf16 glue)
    y = jnp.transpose(y, (0, 3, 1, 2))         # NHWC -> NCHW
    return y.astype(jnp.float32)


# ----------------------------------------------------------------------------
# Pure-JAX reference (for a numerical sanity check)
# ----------------------------------------------------------------------------
def _upsample_block_ref(x_nchw, weight, alpha, r):
    y = jax.lax.conv_general_dilated(
        x_nchw, weight, window_strides=(1, 1), padding="SAME",
        dimension_numbers=("NCHW", "OIHW", "NCHW"),
        preferred_element_type=jnp.float32,
        precision=jax.lax.Precision.HIGHEST)
    N, C, H, W = y.shape
    c = C // (r * r)
    y = y.reshape(N, c, r, r, H, W)
    y = jnp.transpose(y, (0, 1, 4, 2, 5, 3)).reshape(N, c, H * r, W * r)
    a = alpha.reshape(1, c, 1, 1)
    return jnp.where(y >= 0, y, y * a)


# ----------------------------------------------------------------------------
if __name__ == "__main__":
    N, CIN, H, W = 2, 4, 16, 16
    R = 2
    COUT = CIN * R * R

    key = jax.random.PRNGKey(0)
    kx, kw, ka = jax.random.split(key, 3)

    x = jax.random.normal(kx, (N, CIN, H, W), jnp.float32)
    fan_in = 3 * 3 * CIN
    w = jax.random.normal(kw, (COUT, CIN, 3, 3), jnp.float32) * (1.0 / fan_in) ** 0.5
    alpha = 0.25 + 0.1 * jax.random.normal(ka, (CIN,), jnp.float32)

    # tile_h=8 -> grid (N=2, row_tiles=2): exercises both halo paths.
    fwd = jax.jit(functools.partial(upsample_block, scale_factor=R, tile_h=8))
    y = jax.block_until_ready(fwd(x, w, alpha))

    assert y.shape == (N, CIN, H * R, W * R), y.shape
    assert bool(jnp.all(jnp.isfinite(y)))

    # Reference from bf16-cast operands (same MXU input precision, f32 accum),
    # rounded to bf16 like the kernel's output store.
    y_ref = _upsample_block_ref(
        x.astype(jnp.bfloat16).astype(jnp.float32),
        w.astype(jnp.bfloat16).astype(jnp.float32), alpha, R)
    y_ref = y_ref.astype(jnp.bfloat16).astype(jnp.float32)
    ok = bool(jnp.all(jnp.abs(y - y_ref) <= 1e-2 + 2e-2 * jnp.abs(y_ref)))
    assert ok, float(jnp.max(jnp.abs(y - y_ref)))

    print("KERNEL_OK")
</pallas_src>

<mosaic_0001>
module attributes {stable_mosaic.version = 11 : i64} {
  func.func @_conv_prelu_kernel(%arg0: i32, %arg1: i32, %arg2: memref<1x8x18x128xbf16, #tpu.memory_space<vmem>>, %arg3: memref<1x1x18x128xbf16, #tpu.memory_space<vmem>>, %arg4: memref<1x1x18x128xbf16, #tpu.memory_space<vmem>>, %arg5: memref<1152x128xbf16, #tpu.memory_space<vmem>>, %arg6: memref<1x128xf32, #tpu.memory_space<vmem>>, %arg7: memref<1x8x16x128xbf16, #tpu.memory_space<vmem>>, %arg8: memref<128x1152xbf16, #tpu.memory_space<vmem>>) attributes {dimension_semantics = [#tpu.dimension_semantics<parallel>, #tpu.dimension_semantics<parallel>], iteration_bounds = array<i64: 2, 2>, scalar_prefetch = 0 : i64, scratch_operands = 1 : i64, tpu.core_type = #tpu.core_type<tc>, window_params = [{transform_indices = @transform_0, window_bounds = array<i64: 1, 8, 18, 128>}, {transform_indices = @transform_1, window_bounds = array<i64: 1, 1, 18, 128>}, {transform_indices = @transform_2, window_bounds = array<i64: 1, 1, 18, 128>}, {pipeline_mode = #tpu.pipeline_mode<synchronous>, transform_indices = @transform_3, window_bounds = array<i64: 1152, 128>}, {pipeline_mode = #tpu.pipeline_mode<synchronous>, transform_indices = @transform_4, window_bounds = array<i64: 1, 128>}, {transform_indices = @transform_5, window_bounds = array<i64: 1, 8, 16, 128>}]} {
    %c0_i32 = arith.constant 0 : i32
    %0 = arith.cmpi sgt, %arg1, %c0_i32 : i32
    %c0 = arith.constant 0 : index
    %c0_0 = arith.constant 0 : index
    %c0_1 = arith.constant 0 : index
    %c0_2 = arith.constant 0 : index
    %1 = vector.load %arg3[%c0, %c0_0, %c0_1, %c0_2] : memref<1x1x18x128xbf16, #tpu.memory_space<vmem>>, vector<1x1x18x128xbf16>
    %2 = vector.shape_cast %1 : vector<1x1x18x128xbf16> to vector<18x128xbf16>
    %cst = arith.constant 0.000000e+00 : bf16
    %3 = vector.broadcast %cst : bf16 to vector<18x128xbf16>
    %4 = arith.select %0, %2, %3 : vector<18x128xbf16>
    %c1_i32 = arith.constant 1 : i32
    %5 = arith.cmpi slt, %arg1, %c1_i32 : i32
    %c0_3 = arith.constant 0 : index
    %c0_4 = arith.constant 0 : index
    %c0_5 = arith.constant 0 : index
    %c0_6 = arith.constant 0 : index
    %6 = vector.load %arg4[%c0_3, %c0_4, %c0_5, %c0_6] : memref<1x1x18x128xbf16, #tpu.memory_space<vmem>>, vector<1x1x18x128xbf16>
    %7 = vector.shape_cast %6 : vector<1x1x18x128xbf16> to vector<18x128xbf16>
    %cst_7 = arith.constant 0.000000e+00 : bf16
    %8 = vector.broadcast %cst_7 : bf16 to vector<18x128xbf16>
    %9 = arith.select %5, %7, %8 : vector<18x128xbf16>
    %10 = vector.extract_strided_slice %4 {offsets = [0, 0], sizes = [16, 128], strides = [1, 1]} : vector<18x128xbf16> to vector<16x128xbf16>
    %c0_8 = arith.constant 0 : index
    %c0_9 = arith.constant 0 : index
    %11 = vector.load %arg8[%c0_8, %c0_9] : memref<128x1152xbf16, #tpu.memory_space<vmem>>, vector<16x128xbf16>
    tpu.vector_store %arg8[%c0_8, %c0_9], %10 {strides = array<i32>} : memref<128x1152xbf16, #tpu.memory_space<vmem>>, vector<16x128xbf16>,
    %c0_10 = arith.constant 0 : index
    %c0_11 = arith.constant 0 : index
    %c0_12 = arith.constant 0 : index
    %c0_13 = arith.constant 0 : index
    %12 = vector.load %arg2[%c0_10, %c0_11, %c0_12, %c0_13] : memref<1x8x18x128xbf16, #tpu.memory_space<vmem>>, vector<1x7x16x128xbf16>
    %13 = vector.shape_cast %12 : vector<1x7x16x128xbf16> to vector<7x16x128xbf16>
    %14 = vector.shape_cast %13 : vector<7x16x128xbf16> to vector<112x128xbf16>
    %c16 = arith.constant 16 : index
    %c0_14 = arith.constant 0 : index
    %15 = vector.load %arg8[%c16, %c0_14] : memref<128x1152xbf16, #tpu.memory_space<vmem>>, vector<112x128xbf16>
    tpu.vector_store %arg8[%c16, %c0_14], %14 {strides = array<i32>} : memref<128x1152xbf16, #tpu.memory_space<vmem>>, vector<112x128xbf16>,
    %16 = vector.extract_strided_slice %4 {offsets = [1, 0], sizes = [16, 128], strides = [1, 1]} : vector<18x128xbf16> to vector<16x128xbf16>
    %c0_15 = arith.constant 0 : index
    %c128 = arith.constant 128 : index
    %17 = vector.load %arg8[%c0_15, %c128] : memref<128x1152xbf16, #tpu.memory_space<vmem>>, vector<16x128xbf16>
    tpu.vector_store %arg8[%c0_15, %c128], %16 {strides = array<i32>} : memref<128x1152xbf16, #tpu.memory_space<vmem>>, vector<16x128xbf16>,
    %c0_16 = arith.constant 0 : index
    %c0_17 = arith.constant 0 : index
    %c1 = arith.constant 1 : index
    %c0_18 = arith.constant 0 : index
    %18 = vector.load %arg2[%c0_16, %c0_17, %c1, %c0_18] : memref<1x8x18x128xbf16, #tpu.memory_space<vmem>>, vector<1x7x16x128xbf16>
    %19 = vector.shape_cast %18 : vector<1x7x16x128xbf16> to vector<7x16x128xbf16>
    %20 = vector.shape_cast %19 : vector<7x16x128xbf16> to vector<112x128xbf16>
    %c16_19 = arith.constant 16 : index
    %c128_20 = arith.constant 128 : index
    %21 = vector.load %arg8[%c16_19, %c128_20] : memref<128x1152xbf16, #tpu.memory_space<vmem>>, vector<112x128xbf16>
    tpu.vector_store %arg8[%c16_19, %c128_20], %20 {strides = array<i32>} : memref<128x1152xbf16, #tpu.memory_space<vmem>>, vector<112x128xbf16>,
    %22 = vector.extract_strided_slice %4 {offsets = [2, 0], sizes = [16, 128], strides = [1, 1]} : vector<18x128xbf16> to vector<16x128xbf16>
    %c0_21 = arith.constant 0 : index
    %c256 = arith.constant 256 : index
    %23 = vector.load %arg8[%c0_21, %c256] : memref<128x1152xbf16, #tpu.memory_space<vmem>>, vector<16x128xbf16>
    tpu.vector_store %arg8[%c0_21, %c256], %22 {strides = array<i32>} : memref<128x1152xbf16, #tpu.memory_space<vmem>>, vector<16x128xbf16>,
    %c0_22 = arith.constant 0 : index
    %c0_23 = arith.constant 0 : index
    %c2 = arith.constant 2 : index
    %c0_24 = arith.constant 0 : index
    %24 = vector.load %arg2[%c0_22, %c0_23, %c2, %c0_24] : memref<1x8x18x128xbf16, #tpu.memory_space<vmem>>, vector<1x7x16x128xbf16>
    %25 = vector.shape_cast %24 : vector<1x7x16x128xbf16> to vector<7x16x128xbf16>
    %26 = vector.shape_cast %25 : vector<7x16x128xbf16> to vector<112x128xbf16>
    %c16_25 = arith.constant 16 : index
    %c256_26 = arith.constant 256 : index
    %27 = vector.load %arg8[%c16_25, %c256_26] : memref<128x1152xbf16, #tpu.memory_space<vmem>>, vector<112x128xbf16>
    tpu.vector_store %arg8[%c16_25, %c256_26], %26 {strides = array<i32>} : memref<128x1152xbf16, #tpu.memory_space<vmem>>, vector<112x128xbf16>,
    %c0_27 = arith.constant 0 : index
    %c0_28 = arith.constant 0 : index
    %c0_29 = arith.constant 0 : index
    %c0_30 = arith.constant 0 : index
    %28 = vector.load %arg2[%c0_27, %c0_28, %c0_29, %c0_30] : memref<1x8x18x128xbf16, #tpu.memory_space<vmem>>, vector<1x8x16x128xbf16>
    %29 = vector.shape_cast %28 : vector<1x8x16x128xbf16> to vector<8x16x128xbf16>
    %30 = vector.shape_cast %29 : vector<8x16x128xbf16> to vector<128x128xbf16>
    %c0_31 = arith.constant 0 : index
    %c384 = arith.constant 384 : index
    %31 = vector.load %arg8[%c0_31, %c384] : memref<128x1152xbf16, #tpu.memory_space<vmem>>, vector<128x128xbf16>
    tpu.vector_store %arg8[%c0_31, %c384], %30 {strides = array<i32>} : memref<128x1152xbf16, #tpu.memory_space<vmem>>, vector<128x128xbf16>,
    %c0_32 = arith.constant 0 : index
    %c0_33 = arith.constant 0 : index
    %c1_34 = arith.constant 1 : index
    %c0_35 = arith.constant 0 : index
    %32 = vector.load %arg2[%c0_32, %c0_33, %c1_34, %c0_35] : memref<1x8x18x128xbf16, #tpu.memory_space<vmem>>, vector<1x8x16x128xbf16>
    %33 = vector.shape_cast %32 : vector<1x8x16x128xbf16> to vector<8x16x128xbf16>
    %34 = vector.shape_cast %33 : vector<8x16x128xbf16> to vector<128x128xbf16>
    %c0_36 = arith.constant 0 : index
    %c512 = arith.constant 512 : index
    %35 = vector.load %arg8[%c0_36, %c512] : memref<128x1152xbf16, #tpu.memory_space<vmem>>, vector<128x128xbf16>
    tpu.vector_store %arg8[%c0_36, %c512], %34 {strides = array<i32>} : memref<128x1152xbf16, #tpu.memory_space<vmem>>, vector<128x128xbf16>,
    %c0_37 = arith.constant 0 : index
    %c0_38 = arith.constant 0 : index
    %c2_39 = arith.constant 2 : index
    %c0_40 = arith.constant 0 : index
    %36 = vector.load %arg2[%c0_37, %c0_38, %c2_39, %c0_40] : memref<1x8x18x128xbf16, #tpu.memory_space<vmem>>, vector<1x8x16x128xbf16>
    %37 = vector.shape_cast %36 : vector<1x8x16x128xbf16> to vector<8x16x128xbf16>
    %38 = vector.shape_cast %37 : vector<8x16x128xbf16> to vector<128x128xbf16>
    %c0_41 = arith.constant 0 : index
    %c640 = arith.constant 640 : index
    %39 = vector.load %arg8[%c0_41, %c640] : memref<128x1152xbf16, #tpu.memory_space<vmem>>, vector<128x128xbf16>
    tpu.vector_store %arg8[%c0_41, %c640], %38 {strides = array<i32>} : memref<128x1152xbf16, #tpu.memory_space<vmem>>, vector<128x128xbf16>,
    %c0_42 = arith.constant 0 : index
    %c1_43 = arith.constant 1 : index
    %c0_44 = arith.constant 0 : index
    %c0_45 = arith.constant 0 : index
    %40 = vector.load %arg2[%c0_42, %c1_43, %c0_44, %c0_45] : memref<1x8x18x128xbf16, #tpu.memory_space<vmem>>, vector<1x7x16x128xbf16>
    %41 = vector.shape_cast %40 : vector<1x7x16x128xbf16> to vector<7x16x128xbf16>
    %42 = vector.shape_cast %41 : vector<7x16x128xbf16> to vector<112x128xbf16>
    %c0_46 = arith.constant 0 : index
    %c768 = arith.constant 768 : index
    %43 = vector.load %arg8[%c0_46, %c768] : memref<128x1152xbf16, #tpu.memory_space<vmem>>, vector<112x128xbf16>
    tpu.vector_store %arg8[%c0_46, %c768], %42 {strides = array<i32>} : memref<128x1152xbf16, #tpu.memory_space<vmem>>, vector<112x128xbf16>,
    %44 = vector.extract_strided_slice %9 {offsets = [0, 0], sizes = [16, 128], strides = [1, 1]} : vector<18x128xbf16> to vector<16x128xbf16>
    %c112 = arith.constant 112 : index
    %c768_47 = arith.constant 768 : index
    %45 = vector.load %arg8[%c112, %c768_47] : memref<128x1152xbf16, #tpu.memory_space<vmem>>, vector<16x128xbf16>
    tpu.vector_store %arg8[%c112, %c768_47], %44 {strides = array<i32>} : memref<128x1152xbf16, #tpu.memory_space<vmem>>, vector<16x128xbf16>,
    %c0_48 = arith.constant 0 : index
    %c1_49 = arith.constant 1 : index
    %c1_50 = arith.constant 1 : index
    %c0_51 = arith.constant 0 : index
    %46 = vector.load %arg2[%c0_48, %c1_49, %c1_50, %c0_51] : memref<1x8x18x128xbf16, #tpu.memory_space<vmem>>, vector<1x7x16x128xbf16>
    %47 = vector.shape_cast %46 : vector<1x7x16x128xbf16> to vector<7x16x128xbf16>
    %48 = vector.shape_cast %47 : vector<7x16x128xbf16> to vector<112x128xbf16>
    %c0_52 = arith.constant 0 : index
    %c896 = arith.constant 896 : index
    %49 = vector.load %arg8[%c0_52, %c896] : memref<128x1152xbf16, #tpu.memory_space<vmem>>, vector<112x128xbf16>
    tpu.vector_store %arg8[%c0_52, %c896], %48 {strides = array<i32>} : memref<128x1152xbf16, #tpu.memory_space<vmem>>, vector<112x128xbf16>,
    %50 = vector.extract_strided_slice %9 {offsets = [1, 0], sizes = [16, 128], strides = [1, 1]} : vector<18x128xbf16> to vector<16x128xbf16>
    %c112_53 = arith.constant 112 : index
    %c896_54 = arith.constant 896 : index
    %51 = vector.load %arg8[%c112_53, %c896_54] : memref<128x1152xbf16, #tpu.memory_space<vmem>>, vector<16x128xbf16>
    tpu.vector_store %arg8[%c112_53, %c896_54], %50 {strides = array<i32>} : memref<128x1152xbf16, #tpu.memory_space<vmem>>, vector<16x128xbf16>,
    %c0_55 = arith.constant 0 : index
    %c1_56 = arith.constant 1 : index
    %c2_57 = arith.constant 2 : index
    %c0_58 = arith.constant 0 : index
    %52 = vector.load %arg2[%c0_55, %c1_56, %c2_57, %c0_58] : memref<1x8x18x128xbf16, #tpu.memory_space<vmem>>, vector<1x7x16x128xbf16>
    %53 = vector.shape_cast %52 : vector<1x7x16x128xbf16> to vector<7x16x128xbf16>
    %54 = vector.shape_cast %53 : vector<7x16x128xbf16> to vector<112x128xbf16>
    %c0_59 = arith.constant 0 : index
    %c1024 = arith.constant 1024 : index
    %55 = vector.load %arg8[%c0_59, %c1024] : memref<128x1152xbf16, #tpu.memory_space<vmem>>, vector<112x128xbf16>
    tpu.vector_store %arg8[%c0_59, %c1024], %54 {strides = array<i32>} : memref<128x1152xbf16, #tpu.memory_space<vmem>>, vector<112x128xbf16>,
    %56 = vector.extract_strided_slice %9 {offsets = [2, 0], sizes = [16, 128], strides = [1, 1]} : vector<18x128xbf16> to vector<16x128xbf16>
    %c112_60 = arith.constant 112 : index
    %c1024_61 = arith.constant 1024 : index
    %57 = vector.load %arg8[%c112_60, %c1024_61] : memref<128x1152xbf16, #tpu.memory_space<vmem>>, vector<16x128xbf16>
    tpu.vector_store %arg8[%c112_60, %c1024_61], %56 {strides = array<i32>} : memref<128x1152xbf16, #tpu.memory_space<vmem>>, vector<16x128xbf16>,
    %c0_62 = arith.constant 0 : index
    %c0_63 = arith.constant 0 : index
    %58 = vector.load %arg8[%c0_62, %c0_63] : memref<128x1152xbf16, #tpu.memory_space<vmem>>, vector<128x1152xbf16>
    %c0_64 = arith.constant 0 : index
    %c0_65 = arith.constant 0 : index
    %59 = vector.load %arg5[%c0_64, %c0_65] : memref<1152x128xbf16, #tpu.memory_space<vmem>>, vector<1152x128xbf16>
    %cst_66 = arith.constant dense<0.000000e+00> : vector<128x128xf32>
    %60 = tpu.matmul %58, %59, %cst_66 {dimension_numbers = #tpu.dot_dimension_numbers<[1], [0], [0], [1], [0, 0, 1, 1], [], []>} : vector<128x1152xbf16>, vector<1152x128xbf16>, vector<128x128xf32> -> vector<128x128xf32>
    %c0_67 = arith.constant 0 : index
    %c0_68 = arith.constant 0 : index
    %61 = vector.load %arg6[%c0_67, %c0_68] : memref<1x128xf32, #tpu.memory_space<vmem>>, vector<1x128xf32>
    %cst_69 = arith.constant 0.000000e+00 : f32
    %62 = vector.broadcast %cst_69 : f32 to vector<128x128xf32>
    %63 = arith.cmpf oge, %60, %62 : vector<128x128xf32>
    %64 = vector.broadcast %61 : vector<1x128xf32> to vector<128x128xf32>
    %65 = arith.mulf %60, %64 : vector<128x128xf32>
    %66 = arith.select %63, %60, %65 : vector<128x128xi1>, vector<128x128xf32>
    %67 = vector.shape_cast %66 : vector<128x128xf32> to vector<8x16x128xf32>
    %68 = arith.truncf %67 : vector<8x16x128xf32> to vector<8x16x128xbf16>
    %c0_70 = arith.constant 0 : index
    %c0_71 = arith.constant 0 : index
    %c0_72 = arith.constant 0 : index
    %c0_73 = arith.constant 0 : index
    %69 = vector.load %arg7[%c0_70, %c0_71, %c0_72, %c0_73] : memref<1x8x16x128xbf16, #tpu.memory_space<vmem>>, vector<1x8x16x128xbf16>
    %70 = vector.shape_cast %69 : vector<1x8x16x128xbf16> to vector<8x16x128xbf16>
    %71 = vector.shape_cast %68 : vector<8x16x128xbf16> to vector<1x8x16x128xbf16>
    tpu.vector_store %arg7[%c0_70, %c0_71, %c0_72, %c0_73], %71 {strides = array<i32>} : memref<1x8x16x128xbf16, #tpu.memory_space<vmem>>, vector<1x8x16x128xbf16>,
    return
  }
  func.func @transform_0(%arg0: i32, %arg1: i32) -> (i32, i32, i32, i32) {
    %c0_i32 = arith.constant 0 : i32
    %c0_i32_0 = arith.constant 0 : i32
    %c0_i32_1 = arith.constant 0 : i32
    return %arg0, %arg1, %c0_i32, %c0_i32_0 : i32, i32, i32, i32
  }
  func.func @transform_1(%arg0: i32, %arg1: i32) -> (i32, i32, i32, i32) {
    %c8_i32 = arith.constant 8 : i32
    %0 = arith.muli %arg1, %c8_i32 : i32
    %c1_i32 = arith.constant 1 : i32
    %1 = arith.subi %0, %c1_i32 : i32
    %c0_i32 = arith.constant 0 : i32
    %2 = arith.maxsi %1, %c0_i32 : i32
    %c0_i32_0 = arith.constant 0 : i32
    %c0_i32_1 = arith.constant 0 : i32
    %c0_i32_2 = arith.constant 0 : i32
    return %arg0, %2, %c0_i32_0, %c0_i32_1 : i32, i32, i32, i32
  }
  func.func @transform_2(%arg0: i32, %arg1: i32) -> (i32, i32, i32, i32) {
    %c1_i32 = arith.constant 1 : i32
    %0 = arith.addi %arg1, %c1_i32 : i32
    %c8_i32 = arith.constant 8 : i32
    %1 = arith.muli %0, %c8_i32 : i32
    %c15_i32 = arith.constant 15 : i32
    %2 = arith.minsi %1, %c15_i32 : i32
    %c0_i32 = arith.constant 0 : i32
    %c0_i32_0 = arith.constant 0 : i32
    %c0_i32_1 = arith.constant 0 : i32
    return %arg0, %2, %c0_i32, %c0_i32_0 : i32, i32, i32, i32
  }
  func.func @transform_3(%arg0: i32, %arg1: i32) -> (i32, i32) {
    %c0_i32 = arith.constant 0 : i32
    %c0_i32_0 = arith.constant 0 : i32
    %c0_i32_1 = arith.constant 0 : i32
    return %c0_i32, %c0_i32_0 : i32, i32
  }
  func.func @transform_4(%arg0: i32, %arg1: i32) -> (i32, i32) {
    %c0_i32 = arith.constant 0 : i32
    %c0_i32_0 = arith.constant 0 : i32
    %c0_i32_1 = arith.constant 0 : i32
    return %c0_i32, %c0_i32_0 : i32, i32
  }
  func.func @transform_5(%arg0: i32, %arg1: i32) -> (i32, i32, i32, i32) {
    %c0_i32 = arith.constant 0 : i32
    %c0_i32_0 = arith.constant 0 : i32
    %c0_i32_1 = arith.constant 0 : i32
    return %arg0, %arg1, %c0_i32, %c0_i32_0 : i32, i32, i32, i32
  }
}

</mosaic_0001>

<llo_original>
// kernel: upsample_block.1
$region0: #{upsample_block.1}
  #allocation0 [shape = 'u32[]', space=smem, size = 0x4, offset = 0x4, fixed_abs, tag = 'smem constant byte address 0x4 - core index']
  #allocation1 [shape = 'u32[144,128]{1,0:T(1,128)}', space=vmem, size = 0x12000, scoped, tag = 'internal scratch']
  #allocation2 [shape = 'bf16[128,1152]{1,0:T(8,128)(2,1)}', space=vmem, size = 0x48000, scoped, tag = 'scratch operand']
  %s0 = inlined_call_operand.vmem [shape: bf16[2,16,18,128], index: 0, kind: input, shape index: {}, may-alias: {0,1,2}]
  %s1 = inlined_call_operand.vmem [shape: bf16[2,16,18,128], index: 1, kind: input, shape index: {}, may-alias: {0,1,2}]
  %s2 = inlined_call_operand.vmem [shape: bf16[2,16,18,128], index: 2, kind: input, shape index: {}, may-alias: {0,1,2}]
  %s3 = inlined_call_operand.vmem [shape: bf16[1152,128], index: 3, kind: input, shape index: {}]
  %s4 = inlined_call_operand.vmem [shape: f32[1,128], index: 4, kind: input, shape index: {}]
  %s5 = inlined_call_operand.vmem [shape: bf16[2,16,16,128], index: 5, kind: output, shape index: {}]
  %s6 = sld [smem:[#allocation0]]
  $region53: #{upsample_block.1} parent=0
    _
  %s8 = ssub.s32 1, %s6
  %s9 = scalar_select 0, %s8, %s6
  loop: start=0, step=1, limit=6
  $region2: #{upsample_block.1} parent=0 // loop_pre_header
    _
  $region3: #{upsample_block.1} parent=0 // loop_header
    %s11 = sphi 0, %s15
    %p12 = scmp.ge.s32.totalorder %s11, 6
    %s18 = sphi 0, %s30
    %s19 = sphi 0, %s26
    %s20 = sphi 0, %s18
    %s21 = sphi 0, %s19
    %s22 = sphi 0, %s20
    %s23 = sphi 0, %s21
    %s35 = sphi 0, %s37
    %s38 = sphi 0, %s35
    %s39 = sphi 0, %s38
    %s55 = sphi 0, %s39
    %s71 = sphi 0, %s73
    %s74 = sphi 0, %s71
    %s75 = sphi 0, %s74
    %s91 = sphi 0, %s75
    %s107 = sphi 0, %s109
    %s110 = sphi 0, %s107
    %s111 = sphi 0, %s110
    %s127 = sphi 0, %s111
    %s131 = sphi 0, %s131
    %s133 = sphi 0, %s131
    %s134 = sphi 0, %s133
    %s148 = sphi 0, %s134
    %s152 = sphi 0, %s152
    %s154 = sphi 0, %s152
    %s155 = sphi 0, %s154
    %s169 = sphi 0, %s155
    %s177 = sphi 0, %s179
    %s180 = sphi 0, %s177
    %s181 = sphi 0, %s180
    %s197 = sphi 0, %s181
  $region4: #{upsample_block.1} parent=0 // loop_header_branch
    %14 = sbr.rel (%p12) target = $region8
  $region5: #{upsample_block.1} parent=0 // loop_body
    %s16 = ssub.s32 %s11, 1
    %s17 = ssub.s32 %s11, 2
    %s24 = sadd.s32 1, %s19
    %p25 = scmp.ge.s32.totalorder %s24, 2
    %s26 = scalar_select %p25, 0, %s24
    %s27 = sadd.s32 1, %s18
    %s28 = scalar_select %p25, %s27, %s18
    %p29 = scmp.ge.s32.totalorder %s28, 2
    %s30 = scalar_select %p29, 0, %s28
    %s31 = ssub.s32 %s18, %s30
    %s32 = ssub.s32 %s19, %s26
    %s33 = sor.u32 %s31, %s32
    %p34 = scmp.eq.s32.totalorder %s33, 0
    %s36 = sadd.s32 %s35, 1
    %s37 = scalar_select %p34, %s35, %s36
    %p40 = pneg %p34
    %p41 = scmp.eq.s32.totalorder %s11, 3
    %p42 = por %p40, %p41
    %p43 = scmp.ne.s32.totalorder %s35, %s38
    %p44 = scmp.eq.s32.totalorder %s11, 0
    %p45 = por %p43, %p44
    %p46 = scmp.ne.s32.totalorder %s35, %s38
    %p47 = scmp.eq.s32.totalorder %s16, 3
    %p48 = por %p46, %p47
    %p49 = scmp.ne.s32.totalorder %s38, %s39
    %p50 = scmp.eq.s32.totalorder %s16, 0
    %p51 = por %p49, %p50
    %p52 = scmp.ne.s32.totalorder %s38, %s39
    %p53 = scmp.eq.s32.totalorder %s17, 3
    %p54 = por %p52, %p53
    %p56 = scmp.ne.s32.totalorder %s39, %s55
    %p57 = scmp.eq.s32.totalorder %s17, 0
    %p58 = por %p56, %p57
    %s59 = smul.u32 %s19, 8
    %s60 = ssub.s32 %s59, 1
    %p61 = scmp.gt.s32.totalorder %s60, 0
    %s62 = scalar_select %p61, %s60, 0
    %s63 = smul.u32 %s26, 8
    %s64 = ssub.s32 %s63, 1
    %p65 = scmp.gt.s32.totalorder %s64, 0
    %s66 = scalar_select %p65, %s64, 0
    %s67 = ssub.s32 %s18, %s30
    %s68 = ssub.s32 %s62, %s66
    %s69 = sor.u32 %s67, %s68
    %p70 = scmp.eq.s32.totalorder %s69, 0
    %s72 = sadd.s32 %s71, 1
    %s73 = scalar_select %p70, %s71, %s72
    %p76 = pneg %p70
    %p77 = scmp.eq.s32.totalorder %s11, 3
    %p78 = por %p76, %p77
    %p79 = scmp.ne.s32.totalorder %s71, %s74
    %p80 = scmp.eq.s32.totalorder %s11, 0
    %p81 = por %p79, %p80
    %p82 = scmp.ne.s32.totalorder %s71, %s74
    %p83 = scmp.eq.s32.totalorder %s16, 3
    %p84 = por %p82, %p83
    %p85 = scmp.ne.s32.totalorder %s74, %s75
    %p86 = scmp.eq.s32.totalorder %s16, 0
    %p87 = por %p85, %p86
    %p88 = scmp.ne.s32.totalorder %s74, %s75
    %p89 = scmp.eq.s32.totalorder %s17, 3
    %p90 = por %p88, %p89
    %p92 = scmp.ne.s32.totalorder %s75, %s91
    %p93 = scmp.eq.s32.totalorder %s17, 0
    %p94 = por %p92, %p93
    %s95 = sadd.s32 %s19, 1
    %s96 = smul.u32 %s95, 8
    %p97 = scmp.lt.s32.totalorder %s96, 15
    %s98 = scalar_select %p97, %s96, 15
    %s99 = sadd.s32 %s26, 1
    %s100 = smul.u32 %s99, 8
    %p101 = scmp.lt.s32.totalorder %s100, 15
    %s102 = scalar_select %p101, %s100, 15
    %s103 = ssub.s32 %s18, %s30
    %s104 = ssub.s32 %s98, %s102
    %s105 = sor.u32 %s103, %s104
    %p106 = scmp.eq.s32.totalorder %s105, 0
    %s108 = sadd.s32 %s107, 1
    %s109 = scalar_select %p106, %s107, %s108
    %p112 = pneg %p106
    %p113 = scmp.eq.s32.totalorder %s11, 3
    %p114 = por %p112, %p113
    %p115 = scmp.ne.s32.totalorder %s107, %s110
    %p116 = scmp.eq.s32.totalorder %s11, 0
    %p117 = por %p115, %p116
    %p118 = scmp.ne.s32.totalorder %s107, %s110
    %p119 = scmp.eq.s32.totalorder %s16, 3
    %p120 = por %p118, %p119
    %p121 = scmp.ne.s32.totalorder %s110, %s111
    %p122 = scmp.eq.s32.totalorder %s16, 0
    %p123 = por %p121, %p122
    %p124 = scmp.ne.s32.totalorder %s110, %s111
    %p125 = scmp.eq.s32.totalorder %s17, 3
    %p126 = por %p124, %p125
    %p128 = scmp.ne.s32.totalorder %s111, %s127
    %p129 = scmp.eq.s32.totalorder %s17, 0
    %p130 = por %p128, %p129
    %s132 = sadd.s32 %s131, 1
    %p135 = scmp.eq.s32.totalorder %s11, 3
    %p136 = scmp.ne.s32.totalorder %s131, %s133
    %p137 = scmp.eq.s32.totalorder %s11, 0
    %p138 = por %p136, %p137
    %p139 = scmp.ne.s32.totalorder %s131, %s133
    %p140 = scmp.eq.s32.totalorder %s16, 3
    %p141 = por %p139, %p140
    %p142 = scmp.ne.s32.totalorder %s133, %s134
    %p143 = scmp.eq.s32.totalorder %s16, 0
    %p144 = por %p142, %p143
    %p145 = scmp.ne.s32.totalorder %s133, %s134
    %p146 = scmp.eq.s32.totalorder %s17, 3
    %p147 = por %p145, %p146
    %p149 = scmp.ne.s32.totalorder %s134, %s148
    %p150 = scmp.eq.s32.totalorder %s17, 0
    %p151 = por %p149, %p150
    %s153 = sadd.s32 %s152, 1
    %p156 = scmp.eq.s32.totalorder %s11, 3
    %p157 = scmp.ne.s32.totalorder %s152, %s154
    %p158 = scmp.eq.s32.totalorder %s11, 0
    %p159 = por %p157, %p158
    %p160 = scmp.ne.s32.totalorder %s152, %s154
    %p161 = scmp.eq.s32.totalorder %s16, 3
    %p162 = por %p160, %p161
    %p163 = scmp.ne.s32.totalorder %s154, %s155
    %p164 = scmp.eq.s32.totalorder %s16, 0
    %p165 = por %p163, %p164
    %p166 = scmp.ne.s32.totalorder %s154, %s155
    %p167 = scmp.eq.s32.totalorder %s17, 3
    %p168 = por %p166, %p167
    %p170 = scmp.ne.s32.totalorder %s155, %s169
    %p171 = scmp.eq.s32.totalorder %s17, 0
    %p172 = por %p170, %p171
    %s173 = ssub.s32 %s18, %s30
    %s174 = ssub.s32 %s19, %s26
    %s175 = sor.u32 %s173, %s174
    %p176 = scmp.eq.s32.totalorder %s175, 0
    %s178 = sadd.s32 %s177, 1
    %s179 = scalar_select %p176, %s177, %s178
    %p182 = pneg %p176
    %p183 = scmp.eq.s32.totalorder %s11, 3
    %p184 = por %p182, %p183
    %p185 = scmp.ne.s32.totalorder %s177, %s180
    %p186 = scmp.eq.s32.totalorder %s11, 0
    %p187 = por %p185, %p186
    %p188 = scmp.ne.s32.totalorder %s177, %s180
    %p189 = scmp.eq.s32.totalorder %s16, 3
    %p190 = por %p188, %p189
    %p191 = scmp.ne.s32.totalorder %s180, %s181
    %p192 = scmp.eq.s32.totalorder %s16, 0
    %p193 = por %p191, %p192
    %p194 = scmp.ne.s32.totalorder %s180, %s181
    %p195 = scmp.eq.s32.totalorder %s17, 3
    %p196 = por %p194, %p195
    %p198 = scmp.ne.s32.totalorder %s181, %s197
    %p199 = scmp.eq.s32.totalorder %s17, 0
    %p200 = por %p198, %p199
    %p201 = scmp.le.s32.totalorder 1, %s11
    %p202 = scmp.lt.s32.totalorder %s11, 5
    %p203 = pnand %p201, %p202
    %p204 = pneg %p203
    // Predicated region
    $region9: #{upsample_block.1} parent=5 // pred_check
      _
    $region10: #{upsample_block.1} parent=5 // pred_check_branch
      %206 = sbr.rel (%p203) target = $region12
    $region11: #{upsample_block.1} parent=5 // pred_region
      %s207 = ssub.s32 %s11, 1
      // Predicated region
      $region13: #{upsample_block.1} parent=11 // pred_check
        %p208 = pneg %p144
      $region14: #{upsample_block.1} parent=11 // pred_check_branch
        %210 = sbr.rel (%p208) target = $region16
      $region15: #{upsample_block.1} parent=11 // pred_region
        _
      $region16: #{upsample_block.1} parent=11 // pred_fallthru
        _
      // Predicated region
      $region17: #{upsample_block.1} parent=11 // pred_check
        %p211 = pneg %p165
      $region18: #{upsample_block.1} parent=11 // pred_check_branch
        %213 = sbr.rel (%p211) target = $region20
      $region19: #{upsample_block.1} parent=11 // pred_region
        _
      $region20: #{upsample_block.1} parent=11 // pred_fallthru
        _
    $region12: #{upsample_block.1} parent=5 // pred_fallthru
      _
    %p214 = scmp.lt.s32.totalorder %s11, 4
    // Predicated region
    $region21: #{upsample_block.1} parent=5 // pred_check
      %p215 = pneg %p214
    $region22: #{upsample_block.1} parent=5 // pred_check_branch
      %217 = sbr.rel (%p215) target = $region24
    $region23: #{upsample_block.1} parent=5 // pred_region
      // Predicated region
      $region25: #{upsample_block.1} parent=23 // pred_check
        %p218 = pneg %p45
      $region26: #{upsample_block.1} parent=23 // pred_check_branch
        %220 = sbr.rel (%p218) target = $region28
      $region27: #{upsample_block.1} parent=23 // pred_region
        %s221 = smul.u32 8, %s19
        %p222 = scmp.lt.s32.totalorder %s18, 1
        %s223 = scalar_select %p222, %s18, 1
        %p224 = scmp.lt.s32.totalorder %s221, 15
        %s225 = scalar_select %p224, %s221, 15
        %s226 = smul.addr %s225, 3
        %s227 = smul.addr %s223, 48
        %s228 = sadd.s32 %s226, %s227
        %s229 = smul.addr %s228, 4
        %s230 = scalar_lea.vmem %s0, %s229
        %s231 = smul.u32 8, %s19
      $region28: #{upsample_block.1} parent=23 // pred_fallthru
        _
      // Predicated region
      $region29: #{upsample_block.1} parent=23 // pred_check
        %p232 = pneg %p81
      $region30: #{upsample_block.1} parent=23 // pred_check_branch
        %234 = sbr.rel (%p232) target = $region32
      $region31: #{upsample_block.1} parent=23 // pred_region
        %s235 = smul.u32 %s19, 8
        %s236 = ssub.s32 %s235, 1
        %p237 = scmp.gt.s32.totalorder %s236, 0
        %s238 = scalar_select %p237, %s236, 0
        %p239 = scmp.lt.s32.totalorder %s18, 1
        %s240 = scalar_select %p239, %s18, 1
        %p241 = scmp.lt.s32.totalorder %s238, 15
        %s242 = scalar_select %p241, %s238, 15
        %s243 = smul.addr %s242, 3
        %s244 = smul.addr %s240, 48
        %s245 = sadd.s32 %s243, %s244
        %s246 = smul.addr %s245, 4
        %s247 = scalar_lea.vmem %s1, %s246
        %s248 = smul.u32 %s19, 8
        %s249 = ssub.s32 %s248, 1
        %p250 = scmp.gt.s32.totalorder %s249, 0
        %s251 = scalar_select %p250, %s249, 0
      $region32: #{upsample_block.1} parent=23 // pred_fallthru
        _
      // Predicated region
      $region33: #{upsample_block.1} parent=23 // pred_check
        %p252 = pneg %p117
      $region34: #{upsample_block.1} parent=23 // pred_check_branch
        %254 = sbr.rel (%p252) target = $region36
      $region35: #{upsample_block.1} parent=23 // pred_region
        %s255 = sadd.s32 %s19, 1
        %s256 = smul.u32 %s255, 8
        %p257 = scmp.lt.s32.totalorder %s256, 15
        %s258 = scalar_select %p257, %s256, 15
        %p259 = scmp.lt.s32.totalorder %s18, 1
        %s260 = scalar_select %p259, %s18, 1
        %p261 = scmp.lt.s32.totalorder %s258, 15
        %s262 = scalar_select %p261, %s258, 15
        %s263 = smul.addr %s262, 3
        %s264 = smul.addr %s260, 48
        %s265 = sadd.s32 %s263, %s264
        %s266 = smul.addr %s265, 4
        %s267 = scalar_lea.vmem %s2, %s266
        %s268 = sadd.s32 %s19, 1
        %s269 = smul.u32 %s268, 8
        %p270 = scmp.lt.s32.totalorder %s269, 15
        %s271 = scalar_select %p270, %s269, 15
      $region36: #{upsample_block.1} parent=23 // pred_fallthru
        _
    $region24: #{upsample_block.1} parent=5 // pred_fallthru
      _
    %p272 = scmp.le.s32.totalorder 1, %s11
    %p273 = scmp.lt.s32.totalorder %s11, 5
    %p274 = pnand %p272, %p273
    %p275 = pneg %p274
    // Predicated region
    $region37: #{upsample_block.1} parent=5 // pred_check
      _
    $region38: #{upsample_block.1} parent=5 // pred_check_branch
      %277 = sbr.rel (%p274) target = $region40
    $region39: #{upsample_block.1} parent=5 // pred_region
      %s278 = ssub.s32 %s11, 1
      %s279 = smul.u32 8, %s21
      %p280 = scmp.lt.s32.totalorder %s20, 1
      %s281 = scalar_select %p280, %s20, 1
      %p282 = scmp.lt.s32.totalorder %s279, 15
      %s283 = scalar_select %p282, %s279, 15
      %s284 = smul.addr %s283, 3
      %s285 = smul.addr %s281, 48
      %s286 = sadd.s32 %s284, %s285
      %s287 = smul.addr %s286, 4
      %s288 = scalar_lea.vmem %s0, %s287
      %p289 = pneg %p51
      %p290 = pneg %p48
      %s291 = smul.u32 %s21, 8
      %s292 = ssub.s32 %s291, 1
      %p293 = scmp.gt.s32.totalorder %s292, 0
      %s294 = scalar_select %p293, %s292, 0
      %p295 = scmp.lt.s32.totalorder %s20, 1
      %s296 = scalar_select %p295, %s20, 1
      %p297 = scmp.lt.s32.totalorder %s294, 15
      %s298 = scalar_select %p297, %s294, 15
      %s299 = smul.addr %s298, 3
      %s300 = smul.addr %s296, 48
      %s301 = sadd.s32 %s299, %s300
      %s302 = smul.addr %s301, 4
      %s303 = scalar_lea.vmem %s1, %s302
      %p304 = pneg %p87
      %p305 = pneg %p84
      %s306 = sadd.s32 %s21, 1
      %s307 = smul.u32 %s306, 8
      %p308 = scmp.lt.s32.totalorder %s307, 15
      %s309 = scalar_select %p308, %s307, 15
      %p310 = scmp.lt.s32.totalorder %s20, 1
      %s311 = scalar_select %p310, %s20, 1
      %p312 = scmp.lt.s32.totalorder %s309, 15
      %s313 = scalar_select %p312, %s309, 15
      %s314 = smul.addr %s313, 3
      %s315 = smul.addr %s311, 48
      %s316 = sadd.s32 %s314, %s315
      %s317 = smul.addr %s316, 4
      %s318 = scalar_lea.vmem %s2, %s317
      %p319 = pneg %p123
      %p320 = pneg %p120
      %p321 = pneg %p144
      %p322 = pneg %p141
      %p323 = pneg %p165
      %p324 = pneg %p162
      %p325 = pneg %p193
      %p326 = pneg %p190
      %s327 = smul.u32 8, %s21
      %p328 = scmp.lt.s32.totalorder %s20, 1
      %s329 = scalar_select %p328, %s20, 1
      %p330 = scmp.lt.s32.totalorder %s327, 15
      %s331 = scalar_select %p330, %s327, 15
      %s332 = smul.addr %s331, 2
      %s333 = smul.addr %s329, 32
      %s334 = sadd.s32 %s332, %s333
      %s335 = smul.addr %s334, 4
      %s336 = scalar_lea.vmem %s5, %s335
      %s337 = smul.u32 8, %s21
      %p338 = scmp.lt.s32.totalorder %s20, 1
      %s339 = scalar_select %p338, %s20, 1
      %p340 = scmp.lt.s32.totalorder %s337, 15
      %s341 = scalar_select %p340, %s337, 15
      %s342 = smul.addr %s341, 3
      %s343 = smul.addr %s339, 48
      %s344 = sadd.s32 %s342, %s343
      %s345 = smul.addr %s344, 4
      %s346 = scalar_lea.vmem %s0, %s345
      %s347 = smul.u32 8, %s21
      %s348 = smul.u32 %s21, 8
      %s349 = ssub.s32 %s348, 1
      %p350 = scmp.gt.s32.totalorder %s349, 0
      %s351 = scalar_select %p350, %s349, 0
      %p352 = scmp.lt.s32.totalorder %s20, 1
      %s353 = scalar_select %p352, %s20, 1
      %p354 = scmp.lt.s32.totalorder %s351, 15
      %s355 = scalar_select %p354, %s351, 15
      %s356 = smul.addr %s355, 3
      %s357 = smul.addr %s353, 48
      %s358 = sadd.s32 %s356, %s357
      %s359 = smul.addr %s358, 4
      %s360 = scalar_lea.vmem %s1, %s359
      %s361 = smul.u32 %s21, 8
      %s362 = ssub.s32 %s361, 1
      %p363 = scmp.gt.s32.totalorder %s362, 0
      %s364 = scalar_select %p363, %s362, 0
      %s365 = sadd.s32 %s21, 1
      %s366 = smul.u32 %s365, 8
      %p367 = scmp.lt.s32.totalorder %s366, 15
      %s368 = scalar_select %p367, %s366, 15
      %p369 = scmp.lt.s32.totalorder %s20, 1
      %s370 = scalar_select %p369, %s20, 1
      %p371 = scmp.lt.s32.totalorder %s368, 15
      %s372 = scalar_select %p371, %s368, 15
      %s373 = smul.addr %s372, 3
      %s374 = smul.addr %s370, 48
      %s375 = sadd.s32 %s373, %s374
      %s376 = smul.addr %s375, 4
      %s377 = scalar_lea.vmem %s2, %s376
      %s378 = sadd.s32 %s21, 1
      %s379 = smul.u32 %s378, 8
      %p380 = scmp.lt.s32.totalorder %s379, 15
      %s381 = scalar_select %p380, %s379, 15
      %s382 = smul.u32 8, %s21
      %p383 = scmp.lt.s32.totalorder %s20, 1
      %s384 = scalar_select %p383, %s20, 1
      %p385 = scmp.lt.s32.totalorder %s382, 15
      %s386 = scalar_select %p385, %s382, 15
      %s387 = smul.addr %s386, 2
      %s388 = smul.addr %s384, 32
      %s389 = sadd.s32 %s387, %s388
      %s390 = smul.addr %s389, 4
      %s391 = scalar_lea.vmem %s5, %s390
      %s392 = smul.u32 8, %s21
      %p394 = scmp.gt.s32.totalorder %s21, 0
      %v395 = vld [vmem:[%s360] sm:$0xf]
      %v396 = vld [vmem:[%s360 + $0x4] sm:$0xf]
      %v397 = vld [vmem:[%s360 + $0x8] sm:$0x1]
      %s398 = scalar_select %p394, 1, 0
      %v399 = vstv %s398
      %vm400 = vcmp.eq.s32.totalorder %v399, 1
      %v401 = vsel %vm400, %v395, 0
      %v402 = vsel %vm400, %v396, 0
      %v403 = vsel %vm400, %v397, 0
      %p404 = scmp.lt.s32.totalorder %s21, 1
      %v405 = vld [vmem:[%s377] sm:$0xf]
      %v406 = vld [vmem:[%s377 + $0x4] sm:$0xf]
      %v407 = vld [vmem:[%s377 + $0x8] sm:$0x1]
      %s408 = scalar_select %p404, 1, 0
      %v409 = vstv %s408
      %vm410 = vcmp.eq.s32.totalorder %v409, 1
      %v411 = vsel %vm410, %v405, 0
      %v412 = vsel %vm410, %v406, 0
      %v413 = vsel %vm410, %v407, 0
      %414 = vst [vmem:[#allocation2] sm:$0xf] %v401
      %415 = vst [vmem:[#allocation2 + $0x24] sm:$0xf] %v402
      %v416 = vld [vmem:[%s346] sm:$0xf]
      %v417 = vld [vmem:[%s346 + $0x4] sm:$0xf]
      %v418 = vld [vmem:[%s346 + $0xc] sm:$0xf]
      %v419 = vld [vmem:[%s346 + $0x10] sm:$0xf]
      %v420 = vld [vmem:[%s346 + $0x18] sm:$0xf]
      %v421 = vld [vmem:[%s346 + $0x1c] sm:$0xf]
      %v422 = vld [vmem:[%s346 + $0x24] sm:$0xf]
      %v423 = vld [vmem:[%s346 + $0x28] sm:$0xf]
      %v424 = vld [vmem:[%s346 + $0x30] sm:$0xf]
      %v425 = vld [vmem:[%s346 + $0x34] sm:$0xf]
      %v426 = vld [vmem:[%s346 + $0x3c] sm:$0xf]
      %v427 = vld [vmem:[%s346 + $0x40] sm:$0xf]
      %v428 = vld [vmem:[%s346 + $0x48] sm:$0xf]
      %v429 = vld [vmem:[%s346 + $0x4c] sm:$0xf]
      %430 = vst [vmem:[#allocation2 + $0x48] sm:$0xf] %v416
      %431 = vst [vmem:[#allocation2 + $0x6c] sm:$0xf] %v417
      %432 = vst [vmem:[#allocation2 + $0x90] sm:$0xf] %v418
      %433 = vst [vmem:[#allocation2 + $0xb4] sm:$0xf] %v419
      %434 = vst [vmem:[#allocation2 + $0xd8] sm:$0xf] %v420
      %435 = vst [vmem:[#allocation2 + $0xfc] sm:$0xf] %v421
      %436 = vst [vmem:[#allocation2 + $0x120] sm:$0xf] %v422
      %437 = vst [vmem:[#allocation2 + $0x144] sm:$0xf] %v423
      %438 = vst [vmem:[#allocation2 + $0x168] sm:$0xf] %v424
      %439 = vst [vmem:[#allocation2 + $0x18c] sm:$0xf] %v425
      %440 = vst [vmem:[#allocation2 + $0x1b0] sm:$0xf] %v426
      %441 = vst [vmem:[#allocation2 + $0x1d4] sm:$0xf] %v427
      %442 = vst [vmem:[#allocation2 + $0x1f8] sm:$0xf] %v428
      %443 = vst [vmem:[#allocation2 + $0x21c] sm:$0xf] %v429
      %vm444 = vsmask.f32 3328
      %vm445 = vsmask.f32 7440
      %vm446 = vmor %vm444, %vm445
      %v448 = vshrl.u32 %v401, 16
      %v450 = vrot.slane %v448, 4
      %v451 = vshll.u32 %v401, 16
      %v453 = vrot.slane %v451, 5
      %v454 = vor.u32 %v450, %v453
      %v455 = vrot.slane %v454, 4
      %v457 = vshll.u32 %v402, 16
      %v459 = vrot.slane %v457, 5
      %v460 = vsel %vm446, %v455, %v459
      %v461 = vshrl.u32 %v402, 16
      %v463 = vrot.slane %v461, 4
      %v464 = vor.u32 %v463, %v459
      %v465 = vrot.slane %v464, 4
      %v467 = vshll.u32 %v403, 16
      %v469 = vrot.slane %v467, 5
      %v470 = vsel %vm446, %v465, %v469
      %473 = vst [vmem:[#allocation2 + $0x4] sm:$0xf] %v460
      %474 = vst [vmem:[#allocation2 + $0x28] sm:$0xf] %v470
      %v475 = vld [vmem:[%s346] sm:$0xf]
      %v476 = vld [vmem:[%s346 + $0x4] sm:$0xf]
      %v477 = vld [vmem:[%s346 + $0x8] sm:$0x1]
      %v478 = vld [vmem:[%s346 + $0xc] sm:$0xf]
      %v479 = vld [vmem:[%s346 + $0x10] sm:$0xf]
      %v480 = vld [vmem:[%s346 + $0x14] sm:$0x1]
      %v481 = vld [vmem:[%s346 + $0x18] sm:$0xf]
      %v482 = vld [vmem:[%s346 + $0x1c] sm:$0xf]
      %v483 = vld [vmem:[%s346 + $0x20] sm:$0x1]
      %v484 = vld [vmem:[%s346 + $0x24] sm:$0xf]
      %v485 = vld [vmem:[%s346 + $0x28] sm:$0xf]
      %v486 = vld [vmem:[%s346 + $0x2c] sm:$0x1]
      %v487 = vld [vmem:[%s346 + $0x30] sm:$0xf]
      %v488 = vld [vmem:[%s346 + $0x34] sm:$0xf]
      %v489 = vld [vmem:[%s346 + $0x38] sm:$0x1]
      %v490 = vld [vmem:[%s346 + $0x3c] sm:$0xf]
      %v491 = vld [vmem:[%s346 + $0x40] sm:$0xf]
      %v492 = vld [vmem:[%s346 + $0x44] sm:$0x1]
      %v493 = vld [vmem:[%s346 + $0x48] sm:$0xf]
      %v494 = vld [vmem:[%s346 + $0x4c] sm:$0xf]
      %v495 = vld [vmem:[%s346 + $0x50] sm:$0x1]
      %v497 = vshrl.u32 %v475, 16
      %v499 = vrot.slane %v497, 4
      %v500 = vshll.u32 %v475, 16
      %v502 = vrot.slane %v500, 5
      %v503 = vor.u32 %v499, %v502
      %v504 = vrot.slane %v503, 4
      %v506 = vshll.u32 %v476, 16
      %v508 = vrot.slane %v506, 5
      %v509 = vsel %vm446, %v504, %v508
      %v510 = vshrl.u32 %v476, 16
      %v512 = vrot.slane %v510, 4
      %v513 = vor.u32 %v512, %v508
      %v514 = vrot.slane %v513, 4
      %v516 = vshll.u32 %v477, 16
      %v518 = vrot.slane %v516, 5
      %v519 = vsel %vm446, %v514, %v518
      %v521 = vshrl.u32 %v478, 16
      %v523 = vrot.slane %v521, 4
      %v524 = vshll.u32 %v478, 16
      %v526 = vrot.slane %v524, 5
      %v527 = vor.u32 %v523, %v526
      %v528 = vrot.slane %v527, 4
      %v530 = vshll.u32 %v479, 16
      %v532 = vrot.slane %v530, 5
      %v533 = vsel %vm446, %v528, %v532
      %v534 = vshrl.u32 %v479, 16
      %v536 = vrot.slane %v534, 4
      %v537 = vor.u32 %v536, %v532
      %v538 = vrot.slane %v537, 4
      %v540 = vshll.u32 %v480, 16
      %v542 = vrot.slane %v540, 5
      %v543 = vsel %vm446, %v538, %v542
      %v545 = vshrl.u32 %v481, 16
      %v547 = vrot.slane %v545, 4
      %v548 = vshll.u32 %v481, 16
      %v550 = vrot.slane %v548, 5
      %v551 = vor.u32 %v547, %v550
      %v552 = vrot.slane %v551, 4
      %v554 = vshll.u32 %v482, 16
      %v556 = vrot.slane %v554, 5
      %v557 = vsel %vm446, %v552, %v556
      %v558 = vshrl.u32 %v482, 16
      %v560 = vrot.slane %v558, 4
      %v561 = vor.u32 %v560, %v556
      %v562 = vrot.slane %v561, 4
      %v564 = vshll.u32 %v483, 16
      %v566 = vrot.slane %v564, 5
      %v567 = vsel %vm446, %v562, %v566
      %v569 = vshrl.u32 %v484, 16
      %v571 = vrot.slane %v569, 4
      %v572 = vshll.u32 %v484, 16
      %v574 = vrot.slane %v572, 5
      %v575 = vor.u32 %v571, %v574
      %v576 = vrot.slane %v575, 4
      %v578 = vshll.u32 %v485, 16
      %v580 = vrot.slane %v578, 5
      %v581 = vsel %vm446, %v576, %v580
      %v582 = vshrl.u32 %v485, 16
      %v584 = vrot.slane %v582, 4
      %v585 = vor.u32 %v584, %v580
      %v586 = vrot.slane %v585, 4
      %v588 = vshll.u32 %v486, 16
      %v590 = vrot.slane %v588, 5
      %v591 = vsel %vm446, %v586, %v590
      %v593 = vshrl.u32 %v487, 16
      %v595 = vrot.slane %v593, 4
      %v596 = vshll.u32 %v487, 16
      %v598 = vrot.slane %v596, 5
      %v599 = vor.u32 %v595, %v598
      %v600 = vrot.slane %v599, 4
      %v602 = vshll.u32 %v488, 16
      %v604 = vrot.slane %v602, 5
      %v605 = vsel %vm446, %v600, %v604
      %v606 = vshrl.u32 %v488, 16
      %v608 = vrot.slane %v606, 4
      %v609 = vor.u32 %v608, %v604
      %v610 = vrot.slane %v609, 4
      %v612 = vshll.u32 %v489, 16
      %v614 = vrot.slane %v612, 5
      %v615 = vsel %vm446, %v610, %v614
      %v617 = vshrl.u32 %v490, 16
      %v619 = vrot.slane %v617, 4
      %v620 = vshll.u32 %v490, 16
      %v622 = vrot.slane %v620, 5
      %v623 = vor.u32 %v619, %v622
      %v624 = vrot.slane %v623, 4
      %v626 = vshll.u32 %v491, 16
      %v628 = vrot.slane %v626, 5
      %v629 = vsel %vm446, %v624, %v628
      %v630 = vshrl.u32 %v491, 16
      %v632 = vrot.slane %v630, 4
      %v633 = vor.u32 %v632, %v628
      %v634 = vrot.slane %v633, 4
      %v636 = vshll.u32 %v492, 16
      %v638 = vrot.slane %v636, 5
      %v639 = vsel %vm446, %v634, %v638
      %v641 = vshrl.u32 %v493, 16
      %v643 = vrot.slane %v641, 4
      %v644 = vshll.u32 %v493, 16
      %v646 = vrot.slane %v644, 5
      %v647 = vor.u32 %v643, %v646
      %v648 = vrot.slane %v647, 4
      %v650 = vshll.u32 %v494, 16
      %v652 = vrot.slane %v650, 5
      %v653 = vsel %vm446, %v648, %v652
      %v654 = vshrl.u32 %v494, 16
      %v656 = vrot.slane %v654, 4
      %v657 = vor.u32 %v656, %v652
      %v658 = vrot.slane %v657, 4
      %v660 = vshll.u32 %v495, 16
      %v662 = vrot.slane %v660, 5
      %v663 = vsel %vm446, %v658, %v662
      %678 = vst [vmem:[#allocation2 + $0x4c] sm:$0xf] %v509
      %679 = vst [vmem:[#allocation2 + $0x70] sm:$0xf] %v519
      %680 = vst [vmem:[#allocation2 + $0x94] sm:$0xf] %v533
      %681 = vst [vmem:[#allocation2 + $0xb8] sm:$0xf] %v543
      %682 = vst [vmem:[#allocation2 + $0xdc] sm:$0xf] %v557
      %683 = vst [vmem:[#allocation2 + $0x100] sm:$0xf] %v567
      %684 = vst [vmem:[#allocation2 + $0x124] sm:$0xf] %v581
      %685 = vst [vmem:[#allocation2 + $0x148] sm:$0xf] %v591
      %686 = vst [vmem:[#allocation2 + $0x16c] sm:$0xf] %v605
      %687 = vst [vmem:[#allocation2 + $0x190] sm:$0xf] %v615
      %688 = vst [vmem:[#allocation2 + $0x1b4] sm:$0xf] %v629
      %689 = vst [vmem:[#allocation2 + $0x1d8] sm:$0xf] %v639
      %690 = vst [vmem:[#allocation2 + $0x1fc] sm:$0xf] %v653
      %691 = vst [vmem:[#allocation2 + $0x220] sm:$0xf] %v663
      %vm695 = vcmask 1042432
      %vm696 = vcmask 1046532
      %vm697 = vmor %vm695, %vm696
      %v698 = vrot.slane %v401, 5
      %v699 = vrot.slane %v698, 4
      %v700 = vrot.slane %v402, 5
      %v701 = vsel %vm697, %v699, %v700
      %v702 = vrot.slane %v700, 4
      %v703 = vrot.slane %v403, 5
      %v704 = vsel %vm697, %v702, %v703
      %707 = vst [vmem:[#allocation2 + $0x8] sm:$0xf] %v701
      %708 = vst [vmem:[#allocation2 + $0x2c] sm:$0xf] %v704
      %v709 = vld [vmem:[%s346] sm:$0xe]
      %v710 = vld [vmem:[%s346 + $0x4] sm:$0xf]
      %v711 = vld [vmem:[%s346 + $0x8] sm:$0x1]
      %v712 = vld [vmem:[%s346 + $0xc] sm:$0xe]
      %v713 = vld [vmem:[%s346 + $0x10] sm:$0xf]
      %v714 = vld [vmem:[%s346 + $0x14] sm:$0x1]
      %v715 = vld [vmem:[%s346 + $0x18] sm:$0xe]
      %v716 = vld [vmem:[%s346 + $0x1c] sm:$0xf]
      %v717 = vld [vmem:[%s346 + $0x20] sm:$0x1]
      %v718 = vld [vmem:[%s346 + $0x24] sm:$0xe]
      %v719 = vld [vmem:[%s346 + $0x28] sm:$0xf]
      %v720 = vld [vmem:[%s346 + $0x2c] sm:$0x1]
      %v721 = vld [vmem:[%s346 + $0x30] sm:$0xe]
      %v722 = vld [vmem:[%s346 + $0x34] sm:$0xf]
      %v723 = vld [vmem:[%s346 + $0x38] sm:$0x1]
      %v724 = vld [vmem:[%s346 + $0x3c] sm:$0xe]
      %v725 = vld [vmem:[%s346 + $0x40] sm:$0xf]
      %v726 = vld [vmem:[%s346 + $0x44] sm:$0x1]
      %v727 = vld [vmem:[%s346 + $0x48] sm:$0xe]
      %v728 = vld [vmem:[%s346 + $0x4c] sm:$0xf]
      %v729 = vld [vmem:[%s346 + $0x50] sm:$0x1]
      %v751 = vrot.slane %v709, 5
      %v752 = vrot.slane %v751, 4
      %v753 = vrot.slane %v710, 5
      %v754 = vsel %vm697, %v752, %v753
      %v755 = vrot.slane %v753, 4
      %v756 = vrot.slane %v711, 5
      %v757 = vsel %vm697, %v755, %v756
      %v758 = vrot.slane %v712, 5
      %v759 = vrot.slane %v758, 4
      %v760 = vrot.slane %v713, 5
      %v761 = vsel %vm697, %v759, %v760
      %v762 = vrot.slane %v760, 4
      %v763 = vrot.slane %v714, 5
      %v764 = vsel %vm697, %v762, %v763
      %v765 = vrot.slane %v715, 5
      %v766 = vrot.slane %v765, 4
      %v767 = vrot.slane %v716, 5
      %v768 = vsel %vm697, %v766, %v767
      %v769 = vrot.slane %v767, 4
      %v770 = vrot.slane %v717, 5
      %v771 = vsel %vm697, %v769, %v770
      %v772 = vrot.slane %v718, 5
      %v773 = vrot.slane %v772, 4
      %v774 = vrot.slane %v719, 5
      %v775 = vsel %vm697, %v773, %v774
      %v776 = vrot.slane %v774, 4
      %v777 = vrot.slane %v720, 5
      %v778 = vsel %vm697, %v776, %v777
      %v779 = vrot.slane %v721, 5
      %v780 = vrot.slane %v779, 4
      %v781 = vrot.slane %v722, 5
      %v782 = vsel %vm697, %v780, %v781
      %v783 = vrot.slane %v781, 4
      %v784 = vrot.slane %v723, 5
      %v785 = vsel %vm697, %v783, %v784
      %v786 = vrot.slane %v724, 5
      %v787 = vrot.slane %v786, 4
      %v788 = vrot.slane %v725, 5
      %v789 = vsel %vm697, %v787, %v788
      %v790 = vrot.slane %v788, 4
      %v791 = vrot.slane %v726, 5
      %v792 = vsel %vm697, %v790, %v791
      %v793 = vrot.slane %v727, 5
      %v794 = vrot.slane %v793, 4
      %v795 = vrot.slane %v728, 5
      %v796 = vsel %vm697, %v794, %v795
      %v797 = vrot.slane %v795, 4
      %v798 = vrot.slane %v729, 5
      %v799 = vsel %vm697, %v797, %v798
      %814 = vst [vmem:[#allocation2 + $0x50] sm:$0xf] %v754
      %815 = vst [vmem:[#allocation2 + $0x74] sm:$0xf] %v757
      %816 = vst [vmem:[#allocation2 + $0x98] sm:$0xf] %v761
      %817 = vst [vmem:[#allocation2 + $0xbc] sm:$0xf] %v764
      %818 = vst [vmem:[#allocation2 + $0xe0] sm:$0xf] %v768
      %819 = vst [vmem:[#allocation2 + $0x104] sm:$0xf] %v771
      %820 = vst [vmem:[#allocation2 + $0x128] sm:$0xf] %v775
      %821 = vst [vmem:[#allocation2 + $0x14c] sm:$0xf] %v778
      %822 = vst [vmem:[#allocation2 + $0x170] sm:$0xf] %v782
      %823 = vst [vmem:[#allocation2 + $0x194] sm:$0xf] %v785
      %824 = vst [vmem:[#allocation2 + $0x1b8] sm:$0xf] %v789
      %825 = vst [vmem:[#allocation2 + $0x1dc] sm:$0xf] %v792
      %826 = vst [vmem:[#allocation2 + $0x200] sm:$0xf] %v796
      %827 = vst [vmem:[#allocation2 + $0x224] sm:$0xf] %v799
      %v828 = vld [vmem:[%s346] sm:$0xf]
      %v829 = vld [vmem:[%s346 + $0x4] sm:$0xf]
      %v830 = vld [vmem:[%s346 + $0xc] sm:$0xf]
      %v831 = vld [vmem:[%s346 + $0x10] sm:$0xf]
      %v832 = vld [vmem:[%s346 + $0x18] sm:$0xf]
      %v833 = vld [vmem:[%s346 + $0x1c] sm:$0xf]
      %v834 = vld [vmem:[%s346 + $0x24] sm:$0xf]
      %v835 = vld [vmem:[%s346 + $0x28] sm:$0xf]
      %v836 = vld [vmem:[%s346 + $0x30] sm:$0xf]
      %v837 = vld [vmem:[%s346 + $0x34] sm:$0xf]
      %v838 = vld [vmem:[%s346 + $0x3c] sm:$0xf]
      %v839 = vld [vmem:[%s346 + $0x40] sm:$0xf]
      %v840 = vld [vmem:[%s346 + $0x48] sm:$0xf]
      %v841 = vld [vmem:[%s346 + $0x4c] sm:$0xf]
      %v842 = vld [vmem:[%s346 + $0x54] sm:$0xf]
      %v843 = vld [vmem:[%s346 + $0x58] sm:$0xf]
      %844 = vst [vmem:[#allocation2 + $0xc] sm:$0xf] %v828
      %845 = vst [vmem:[#allocation2 + $0x30] sm:$0xf] %v829
      %846 = vst [vmem:[#allocation2 + $0x54] sm:$0xf] %v830
      %847 = vst [vmem:[#allocation2 + $0x78] sm:$0xf] %v831
      %848 = vst [vmem:[#allocation2 + $0x9c] sm:$0xf] %v832
      %849 = vst [vmem:[#allocation2 + $0xc0] sm:$0xf] %v833
      %850 = vst [vmem:[#allocation2 + $0xe4] sm:$0xf] %v834
      %851 = vst [vmem:[#allocation2 + $0x108] sm:$0xf] %v835
      %852 = vst [vmem:[#allocation2 + $0x12c] sm:$0xf] %v836
      %853 = vst [vmem:[#allocation2 + $0x150] sm:$0xf] %v837
      %854 = vst [vmem:[#allocation2 + $0x174] sm:$0xf] %v838
      %855 = vst [vmem:[#allocation2 + $0x198] sm:$0xf] %v839
      %856 = vst [vmem:[#allocation2 + $0x1bc] sm:$0xf] %v840
      %857 = vst [vmem:[#allocation2 + $0x1e0] sm:$0xf] %v841
      %858 = vst [vmem:[#allocation2 + $0x204] sm:$0xf] %v842
      %859 = vst [vmem:[#allocation2 + $0x228] sm:$0xf] %v843
      %v860 = vld [vmem:[%s346] sm:$0xf]
      %v861 = vld [vmem:[%s346 + $0x4] sm:$0xf]
      %v862 = vld [vmem:[%s346 + $0x8] sm:$0x1]
      %v863 = vld [vmem:[%s346 + $0xc] sm:$0xf]
      %v864 = vld [vmem:[%s346 + $0x10] sm:$0xf]
      %v865 = vld [vmem:[%s346 + $0x14] sm:$0x1]
      %v866 = vld [vmem:[%s346 + $0x18] sm:$0xf]
      %v867 = vld [vmem:[%s346 + $0x1c] sm:$0xf]
      %v868 = vld [vmem:[%s346 + $0x20] sm:$0x1]
      %v869 = vld [vmem:[%s346 + $0x24] sm:$0xf]
      %v870 = vld [vmem:[%s346 + $0x28] sm:$0xf]
      %v871 = vld [vmem:[%s346 + $0x2c] sm:$0x1]
      %v872 = vld [vmem:[%s346 + $0x30] sm:$0xf]
      %v873 = vld [vmem:[%s346 + $0x34] sm:$0xf]
      %v874 = vld [vmem:[%s346 + $0x38] sm:$0x1]
      %v875 = vld [vmem:[%s346 + $0x3c] sm:$0xf]
      %v876 = vld [vmem:[%s346 + $0x40] sm:$0xf]
      %v877 = vld [vmem:[%s346 + $0x44] sm:$0x1]
      %v878 = vld [vmem:[%s346 + $0x48] sm:$0xf]
      %v879 = vld [vmem:[%s346 + $0x4c] sm:$0xf]
      %v880 = vld [vmem:[%s346 + $0x50] sm:$0x1]
      %v881 = vld [vmem:[%s346 + $0x54] sm:$0xf]
      %v882 = vld [vmem:[%s346 + $0x58] sm:$0xf]
      %v883 = vld [vmem:[%s346 + $0x5c] sm:$0x1]
      %v885 = vshrl.u32 %v860, 16
      %v887 = vrot.slane %v885, 4
      %v888 = vshll.u32 %v860, 16
      %v890 = vrot.slane %v888, 5
      %v891 = vor.u32 %v887, %v890
      %v892 = vrot.slane %v891, 4
      %v894 = vshll.u32 %v861, 16
      %v896 = vrot.slane %v894, 5
      %v897 = vsel %vm446, %v892, %v896
      %v898 = vshrl.u32 %v861, 16
      %v900 = vrot.slane %v898, 4
      %v901 = vor.u32 %v900, %v896
      %v902 = vrot.slane %v901, 4
      %v904 = vshll.u32 %v862, 16
      %v906 = vrot.slane %v904, 5
      %v907 = vsel %vm446, %v902, %v906
      %v909 = vshrl.u32 %v863, 16
      %v911 = vrot.slane %v909, 4
      %v912 = vshll.u32 %v863, 16
      %v914 = vrot.slane %v912, 5
      %v915 = vor.u32 %v911, %v914
      %v916 = vrot.slane %v915, 4
      %v918 = vshll.u32 %v864, 16
      %v920 = vrot.slane %v918, 5
      %v921 = vsel %vm446, %v916, %v920
      %v922 = vshrl.u32 %v864, 16
      %v924 = vrot.slane %v922, 4
      %v925 = vor.u32 %v924, %v920
      %v926 = vrot.slane %v925, 4
      %v928 = vshll.u32 %v865, 16
      %v930 = vrot.slane %v928, 5
      %v931 = vsel %vm446, %v926, %v930
      %v933 = vshrl.u32 %v866, 16
      %v935 = vrot.slane %v933, 4
      %v936 = vshll.u32 %v866, 16
      %v938 = vrot.slane %v936, 5
      %v939 = vor.u32 %v935, %v938
      %v940 = vrot.slane %v939, 4
      %v942 = vshll.u32 %v867, 16
      %v944 = vrot.slane %v942, 5
      %v945 = vsel %vm446, %v940, %v944
      %v946 = vshrl.u32 %v867, 16
      %v948 = vrot.slane %v946, 4
      %v949 = vor.u32 %v948, %v944
      %v950 = vrot.slane %v949, 4
      %v952 = vshll.u32 %v868, 16
      %v954 = vrot.slane %v952, 5
      %v955 = vsel %vm446, %v950, %v954
      %v957 = vshrl.u32 %v869, 16
      %v959 = vrot.slane %v957, 4
      %v960 = vshll.u32 %v869, 16
      %v962 = vrot.slane %v960, 5
      %v963 = vor.u32 %v959, %v962
      %v964 = vrot.slane %v963, 4
      %v966 = vshll.u32 %v870, 16
      %v968 = vrot.slane %v966, 5
      %v969 = vsel %vm446, %v964, %v968
      %v970 = vshrl.u32 %v870, 16
      %v972 = vrot.slane %v970, 4
      %v973 = vor.u32 %v972, %v968
      %v974 = vrot.slane %v973, 4
      %v976 = vshll.u32 %v871, 16
      %v978 = vrot.slane %v976, 5
      %v979 = vsel %vm446, %v974, %v978
      %v981 = vshrl.u32 %v872, 16
      %v983 = vrot.slane %v981, 4
      %v984 = vshll.u32 %v872, 16
      %v986 = vrot.slane %v984, 5
      %v987 = vor.u32 %v983, %v986
      %v988 = vrot.slane %v987, 4
      %v990 = vshll.u32 %v873, 16
      %v992 = vrot.slane %v990, 5
      %v993 = vsel %vm446, %v988, %v992
      %v994 = vshrl.u32 %v873, 16
      %v996 = vrot.slane %v994, 4
      %v997 = vor.u32 %v996, %v992
      %v998 = vrot.slane %v997, 4
      %v1000 = vshll.u32 %v874, 16
      %v1002 = vrot.slane %v1000, 5
      %v1003 = vsel %vm446, %v998, %v1002
      %v1005 = vshrl.u32 %v875, 16
      %v1007 = vrot.slane %v1005, 4
      %v1008 = vshll.u32 %v875, 16
      %v1010 = vrot.slane %v1008, 5
      %v1011 = vor.u32 %v1007, %v1010
      %v1012 = vrot.slane %v1011, 4
      %v1014 = vshll.u32 %v876, 16
      %v1016 = vrot.slane %v1014, 5
      %v1017 = vsel %vm446, %v1012, %v1016
      %v1018 = vshrl.u32 %v876, 16
      %v1020 = vrot.slane %v1018, 4
      %v1021 = vor.u32 %v1020, %v1016
      %v1022 = vrot.slane %v1021, 4
      %v1024 = vshll.u32 %v877, 16
      %v1026 = vrot.slane %v1024, 5
      %v1027 = vsel %vm446, %v1022, %v1026
      %v1029 = vshrl.u32 %v878, 16
      %v1031 = vrot.slane %v1029, 4
      %v1032 = vshll.u32 %v878, 16
      %v1034 = vrot.slane %v1032, 5
      %v1035 = vor.u32 %v1031, %v1034
      %v1036 = vrot.slane %v1035, 4
      %v1038 = vshll.u32 %v879, 16
      %v1040 = vrot.slane %v1038, 5
      %v1041 = vsel %vm446, %v1036, %v1040
      %v1042 = vshrl.u32 %v879, 16
      %v1044 = vrot.slane %v1042, 4
      %v1045 = vor.u32 %v1044, %v1040
      %v1046 = vrot.slane %v1045, 4
      %v1048 = vshll.u32 %v880, 16
      %v1050 = vrot.slane %v1048, 5
      %v1051 = vsel %vm446, %v1046, %v1050
      %v1053 = vshrl.u32 %v881, 16
      %v1055 = vrot.slane %v1053, 4
      %v1056 = vshll.u32 %v881, 16
      %v1058 = vrot.slane %v1056, 5
      %v1059 = vor.u32 %v1055, %v1058
      %v1060 = vrot.slane %v1059, 4
      %v1062 = vshll.u32 %v882, 16
      %v1064 = vrot.slane %v1062, 5
      %v1065 = vsel %vm446, %v1060, %v1064
      %v1066 = vshrl.u32 %v882, 16
      %v1068 = vrot.slane %v1066, 4
      %v1069 = vor.u32 %v1068, %v1064
      %v1070 = vrot.slane %v1069, 4
      %v1072 = vshll.u32 %v883, 16
      %v1074 = vrot.slane %v1072, 5
      %v1075 = vsel %vm446, %v1070, %v1074
      %1092 = vst [vmem:[#allocation2 + $0x10] sm:$0xf] %v897
      %1093 = vst [vmem:[#allocation2 + $0x34] sm:$0xf] %v907
      %1094 = vst [vmem:[#allocation2 + $0x58] sm:$0xf] %v921
      %1095 = vst [vmem:[#allocation2 + $0x7c] sm:$0xf] %v931
      %1096 = vst [vmem:[#allocation2 + $0xa0] sm:$0xf] %v945
      %1097 = vst [vmem:[#allocation2 + $0xc4] sm:$0xf] %v955
      %1098 = vst [vmem:[#allocation2 + $0xe8] sm:$0xf] %v969
      %1099 = vst [vmem:[#allocation2 + $0x10c] sm:$0xf] %v979
      %1100 = vst [vmem:[#allocation2 + $0x130] sm:$0xf] %v993
      %1101 = vst [vmem:[#allocation2 + $0x154] sm:$0xf] %v1003
      %1102 = vst [vmem:[#allocation2 + $0x178] sm:$0xf] %v1017
      %1103 = vst [vmem:[#allocation2 + $0x19c] sm:$0xf] %v1027
      %1104 = vst [vmem:[#allocation2 + $0x1c0] sm:$0xf] %v1041
      %1105 = vst [vmem:[#allocation2 + $0x1e4] sm:$0xf] %v1051
      %1106 = vst [vmem:[#allocation2 + $0x208] sm:$0xf] %v1065
      %1107 = vst [vmem:[#allocation2 + $0x22c] sm:$0xf] %v1075
      %v1108 = vld [vmem:[%s346] sm:$0xe]
      %v1109 = vld [vmem:[%s346 + $0x4] sm:$0xf]
      %v1110 = vld [vmem:[%s346 + $0x8] sm:$0x1]
      %v1111 = vld [vmem:[%s346 + $0xc] sm:$0xe]
      %v1112 = vld [vmem:[%s346 + $0x10] sm:$0xf]
      %v1113 = vld [vmem:[%s346 + $0x14] sm:$0x1]
      %v1114 = vld [vmem:[%s346 + $0x18] sm:$0xe]
      %v1115 = vld [vmem:[%s346 + $0x1c] sm:$0xf]
      %v1116 = vld [vmem:[%s346 + $0x20] sm:$0x1]
      %v1117 = vld [vmem:[%s346 + $0x24] sm:$0xe]
      %v1118 = vld [vmem:[%s346 + $0x28] sm:$0xf]
      %v1119 = vld [vmem:[%s346 + $0x2c] sm:$0x1]
      %v1120 = vld [vmem:[%s346 + $0x30] sm:$0xe]
      %v1121 = vld [vmem:[%s346 + $0x34] sm:$0xf]
      %v1122 = vld [vmem:[%s346 + $0x38] sm:$0x1]
      %v1123 = vld [vmem:[%s346 + $0x3c] sm:$0xe]
      %v1124 = vld [vmem:[%s346 + $0x40] sm:$0xf]
      %v1125 = vld [vmem:[%s346 + $0x44] sm:$0x1]
      %v1126 = vld [vmem:[%s346 + $0x48] sm:$0xe]
      %v1127 = vld [vmem:[%s346 + $0x4c] sm:$0xf]
      %v1128 = vld [vmem:[%s346 + $0x50] sm:$0x1]
      %v1129 = vld [vmem:[%s346 + $0x54] sm:$0xe]
      %v1130 = vld [vmem:[%s346 + $0x58] sm:$0xf]
      %v1131 = vld [vmem:[%s346 + $0x5c] sm:$0x1]
      %v1156 = vrot.slane %v1108, 5
      %v1157 = vrot.slane %v1156, 4
      %v1158 = vrot.slane %v1109, 5
      %v1159 = vsel %vm697, %v1157, %v1158
      %v1160 = vrot.slane %v1158, 4
      %v1161 = vrot.slane %v1110, 5
      %v1162 = vsel %vm697, %v1160, %v1161
      %v1163 = vrot.slane %v1111, 5
      %v1164 = vrot.slane %v1163, 4
      %v1165 = vrot.slane %v1112, 5
      %v1166 = vsel %vm697, %v1164, %v1165
      %v1167 = vrot.slane %v1165, 4
      %v1168 = vrot.slane %v1113, 5
      %v1169 = vsel %vm697, %v1167, %v1168
      %v1170 = vrot.slane %v1114, 5
      %v1171 = vrot.slane %v1170, 4
      %v1172 = vrot.slane %v1115, 5
      %v1173 = vsel %vm697, %v1171, %v1172
      %v1174 = vrot.slane %v1172, 4
      %v1175 = vrot.slane %v1116, 5
      %v1176 = vsel %vm697, %v1174, %v1175
      %v1177 = vrot.slane %v1117, 5
      %v1178 = vrot.slane %v1177, 4
      %v1179 = vrot.slane %v1118, 5
      %v1180 = vsel %vm697, %v1178, %v1179
      %v1181 = vrot.slane %v1179, 4
      %v1182 = vrot.slane %v1119, 5
      %v1183 = vsel %vm697, %v1181, %v1182
      %v1184 = vrot.slane %v1120, 5
      %v1185 = vrot.slane %v1184, 4
      %v1186 = vrot.slane %v1121, 5
      %v1187 = vsel %vm697, %v1185, %v1186
      %v1188 = vrot.slane %v1186, 4
      %v1189 = vrot.slane %v1122, 5
      %v1190 = vsel %vm697, %v1188, %v1189
      %v1191 = vrot.slane %v1123, 5
      %v1192 = vrot.slane %v1191, 4
      %v1193 = vrot.slane %v1124, 5
      %v1194 = vsel %vm697, %v1192, %v1193
      %v1195 = vrot.slane %v1193, 4
      %v1196 = vrot.slane %v1125, 5
      %v1197 = vsel %vm697, %v1195, %v1196
      %v1198 = vrot.slane %v1126, 5
      %v1199 = vrot.slane %v1198, 4
      %v1200 = vrot.slane %v1127, 5
      %v1201 = vsel %vm697, %v1199, %v1200
      %v1202 = vrot.slane %v1200, 4
      %v1203 = vrot.slane %v1128, 5
      %v1204 = vsel %vm697, %v1202, %v1203
      %v1205 = vrot.slane %v1129, 5
      %v1206 = vrot.slane %v1205, 4
      %v1207 = vrot.slane %v1130, 5
      %v1208 = vsel %vm697, %v1206, %v1207
      %v1209 = vrot.slane %v1207, 4
      %v1210 = vrot.slane %v1131, 5
      %v1211 = vsel %vm697, %v1209, %v1210
      %1228 = vst [vmem:[#allocation2 + $0x14] sm:$0xf] %v1159
      %1229 = vst [vmem:[#allocation2 + $0x38] sm:$0xf] %v1162
      %1230 = vst [vmem:[#allocation2 + $0x5c] sm:$0xf] %v1166
      %1231 = vst [vmem:[#allocation2 + $0x80] sm:$0xf] %v1169
      %1232 = vst [vmem:[#allocation2 + $0xa4] sm:$0xf] %v1173
      %1233 = vst [vmem:[#allocation2 + $0xc8] sm:$0xf] %v1176
      %1234 = vst [vmem:[#allocation2 + $0xec] sm:$0xf] %v1180
      %1235 = vst [vmem:[#allocation2 + $0x110] sm:$0xf] %v1183
      %1236 = vst [vmem:[#allocation2 + $0x134] sm:$0xf] %v1187
      %1237 = vst [vmem:[#allocation2 + $0x158] sm:$0xf] %v1190
      %1238 = vst [vmem:[#allocation2 + $0x17c] sm:$0xf] %v1194
      %1239 = vst [vmem:[#allocation2 + $0x1a0] sm:$0xf] %v1197
      %1240 = vst [vmem:[#allocation2 + $0x1c4] sm:$0xf] %v1201
      %1241 = vst [vmem:[#allocation2 + $0x1e8] sm:$0xf] %v1204
      %1242 = vst [vmem:[#allocation2 + $0x20c] sm:$0xf] %v1208
      %1243 = vst [vmem:[#allocation2 + $0x230] sm:$0xf] %v1211
      %s1244 = scalar_lea.vmem %s346, 12
      %v1245 = vld [vmem:[%s1244] sm:$0xf]
      %v1246 = vld [vmem:[%s1244 + $0x4] sm:$0xf]
      %v1247 = vld [vmem:[%s1244 + $0xc] sm:$0xf]
      %v1248 = vld [vmem:[%s1244 + $0x10] sm:$0xf]
      %v1249 = vld [vmem:[%s1244 + $0x18] sm:$0xf]
      %v1250 = vld [vmem:[%s1244 + $0x1c] sm:$0xf]
      %v1251 = vld [vmem:[%s1244 + $0x24] sm:$0xf]
      %v1252 = vld [vmem:[%s1244 + $0x28] sm:$0xf]
      %v1253 = vld [vmem:[%s1244 + $0x30] sm:$0xf]
      %v1254 = vld [vmem:[%s1244 + $0x34] sm:$0xf]
      %v1255 = vld [vmem:[%s1244 + $0x3c] sm:$0xf]
      %v1256 = vld [vmem:[%s1244 + $0x40] sm:$0xf]
      %v1257 = vld [vmem:[%s1244 + $0x48] sm:$0xf]
      %v1258 = vld [vmem:[%s1244 + $0x4c] sm:$0xf]
      %1259 = vst [vmem:[#allocation2 + $0x18] sm:$0xf] %v1245
      %1260 = vst [vmem:[#allocation2 + $0x3c] sm:$0xf] %v1246
      %1261 = vst [vmem:[#allocation2 + $0x60] sm:$0xf] %v1247
      %1262 = vst [vmem:[#allocation2 + $0x84] sm:$0xf] %v1248
      %1263 = vst [vmem:[#allocation2 + $0xa8] sm:$0xf] %v1249
      %1264 = vst [vmem:[#allocation2 + $0xcc] sm:$0xf] %v1250
      %1265 = vst [vmem:[#allocation2 + $0xf0] sm:$0xf] %v1251
      %1266 = vst [vmem:[#allocation2 + $0x114] sm:$0xf] %v1252
      %1267 = vst [vmem:[#allocation2 + $0x138] sm:$0xf] %v1253
      %1268 = vst [vmem:[#allocation2 + $0x15c] sm:$0xf] %v1254
      %1269 = vst [vmem:[#allocation2 + $0x180] sm:$0xf] %v1255
      %1270 = vst [vmem:[#allocation2 + $0x1a4] sm:$0xf] %v1256
      %1271 = vst [vmem:[#allocation2 + $0x1c8] sm:$0xf] %v1257
      %1272 = vst [vmem:[#allocation2 + $0x1ec] sm:$0xf] %v1258
      %1273 = vst [vmem:[#allocation2 + $0x210] sm:$0xf] %v411
      %1274 = vst [vmem:[#allocation2 + $0x234] sm:$0xf] %v412
      %v1275 = vld [vmem:[%s1244] sm:$0xf]
      %v1276 = vld [vmem:[%s1244 + $0x4] sm:$0xf]
      %v1277 = vld [vmem:[%s1244 + $0x8] sm:$0x1]
      %v1278 = vld [vmem:[%s1244 + $0xc] sm:$0xf]
      %v1279 = vld [vmem:[%s1244 + $0x10] sm:$0xf]
      %v1280 = vld [vmem:[%s1244 + $0x14] sm:$0x1]
      %v1281 = vld [vmem:[%s1244 + $0x18] sm:$0xf]
      %v1282 = vld [vmem:[%s1244 + $0x1c] sm:$0xf]
      %v1283 = vld [vmem:[%s1244 + $0x20] sm:$0x1]
      %v1284 = vld [vmem:[%s1244 + $0x24] sm:$0xf]
      %v1285 = vld [vmem:[%s1244 + $0x28] sm:$0xf]
      %v1286 = vld [vmem:[%s1244 + $0x2c] sm:$0x1]
      %v1287 = vld [vmem:[%s1244 + $0x30] sm:$0xf]
      %v1288 = vld [vmem:[%s1244 + $0x34] sm:$0xf]
      %v1289 = vld [vmem:[%s1244 + $0x38] sm:$0x1]
      %v1290 = vld [vmem:[%s1244 + $0x3c] sm:$0xf]
      %v1291 = vld [vmem:[%s1244 + $0x40] sm:$0xf]
      %v1292 = vld [vmem:[%s1244 + $0x44] sm:$0x1]
      %v1293 = vld [vmem:[%s1244 + $0x48] sm:$0xf]
      %v1294 = vld [vmem:[%s1244 + $0x4c] sm:$0xf]
      %v1295 = vld [vmem:[%s1244 + $0x50] sm:$0x1]
      %v1297 = vshrl.u32 %v1275, 16
      %v1299 = vrot.slane %v1297, 4
      %v1300 = vshll.u32 %v1275, 16
      %v1302 = vrot.slane %v1300, 5
      %v1303 = vor.u32 %v1299, %v1302
      %v1304 = vrot.slane %v1303, 4
      %v1306 = vshll.u32 %v1276, 16
      %v1308 = vrot.slane %v1306, 5
      %v1309 = vsel %vm446, %v1304, %v1308
      %v1310 = vshrl.u32 %v1276, 16
      %v1312 = vrot.slane %v1310, 4
      %v1313 = vor.u32 %v1312, %v1308
      %v1314 = vrot.slane %v1313, 4
      %v1316 = vshll.u32 %v1277, 16
      %v1318 = vrot.slane %v1316, 5
      %v1319 = vsel %vm446, %v1314, %v1318
      %v1321 = vshrl.u32 %v1278, 16
      %v1323 = vrot.slane %v1321, 4
      %v1324 = vshll.u32 %v1278, 16
      %v1326 = vrot.slane %v1324, 5
      %v1327 = vor.u32 %v1323, %v1326
      %v1328 = vrot.slane %v1327, 4
      %v1330 = vshll.u32 %v1279, 16
      %v1332 = vrot.slane %v1330, 5
      %v1333 = vsel %vm446, %v1328, %v1332
      %v1334 = vshrl.u32 %v1279, 16
      %v1336 = vrot.slane %v1334, 4
      %v1337 = vor.u32 %v1336, %v1332
      %v1338 = vrot.slane %v1337, 4
      %v1340 = vshll.u32 %v1280, 16
      %v1342 = vrot.slane %v1340, 5
      %v1343 = vsel %vm446, %v1338, %v1342
      %v1345 = vshrl.u32 %v1281, 16
      %v1347 = vrot.slane %v1345, 4
      %v1348 = vshll.u32 %v1281, 16
      %v1350 = vrot.slane %v1348, 5
      %v1351 = vor.u32 %v1347, %v1350
      %v1352 = vrot.slane %v1351, 4
      %v1354 = vshll.u32 %v1282, 16
      %v1356 = vrot.slane %v1354, 5
      %v1357 = vsel %vm446, %v1352, %v1356
      %v1358 = vshrl.u32 %v1282, 16
      %v1360 = vrot.slane %v1358, 4
      %v1361 = vor.u32 %v1360, %v1356
      %v1362 = vrot.slane %v1361, 4
      %v1364 = vshll.u32 %v1283, 16
      %v1366 = vrot.slane %v1364, 5
      %v1367 = vsel %vm446, %v1362, %v1366
      %v1369 = vshrl.u32 %v1284, 16
      %v1371 = vrot.slane %v1369, 4
      %v1372 = vshll.u32 %v1284, 16
      %v1374 = vrot.slane %v1372, 5
      %v1375 = vor.u32 %v1371, %v1374
      %v1376 = vrot.slane %v1375, 4
      %v1378 = vshll.u32 %v1285, 16
      %v1380 = vrot.slane %v1378, 5
      %v1381 = vsel %vm446, %v1376, %v1380
      %v1382 = vshrl.u32 %v1285, 16
      %v1384 = vrot.slane %v1382, 4
      %v1385 = vor.u32 %v1384, %v1380
      %v1386 = vrot.slane %v1385, 4
      %v1388 = vshll.u32 %v1286, 16
      %v1390 = vrot.slane %v1388, 5
      %v1391 = vsel %vm446, %v1386, %v1390
      %v1393 = vshrl.u32 %v1287, 16
      %v1395 = vrot.slane %v1393, 4
      %v1396 = vshll.u32 %v1287, 16
      %v1398 = vrot.slane %v1396, 5
      %v1399 = vor.u32 %v1395, %v1398
      %v1400 = vrot.slane %v1399, 4
      %v1402 = vshll.u32 %v1288, 16
      %v1404 = vrot.slane %v1402, 5
      %v1405 = vsel %vm446, %v1400, %v1404
      %v1406 = vshrl.u32 %v1288, 16
      %v1408 = vrot.slane %v1406, 4
      %v1409 = vor.u32 %v1408, %v1404
      %v1410 = vrot.slane %v1409, 4
      %v1412 = vshll.u32 %v1289, 16
      %v1414 = vrot.slane %v1412, 5
      %v1415 = vsel %vm446, %v1410, %v1414
      %v1417 = vshrl.u32 %v1290, 16
      %v1419 = vrot.slane %v1417, 4
      %v1420 = vshll.u32 %v1290, 16
      %v1422 = vrot.slane %v1420, 5
      %v1423 = vor.u32 %v1419, %v1422
      %v1424 = vrot.slane %v1423, 4
      %v1426 = vshll.u32 %v1291, 16
      %v1428 = vrot.slane %v1426, 5
      %v1429 = vsel %vm446, %v1424, %v1428
      %v1430 = vshrl.u32 %v1291, 16
      %v1432 = vrot.slane %v1430, 4
      %v1433 = vor.u32 %v1432, %v1428
      %v1434 = vrot.slane %v1433, 4
      %v1436 = vshll.u32 %v1292, 16
      %v1438 = vrot.slane %v1436, 5
      %v1439 = vsel %vm446, %v1434, %v1438
      %v1441 = vshrl.u32 %v1293, 16
      %v1443 = vrot.slane %v1441, 4
      %v1444 = vshll.u32 %v1293, 16
      %v1446 = vrot.slane %v1444, 5
      %v1447 = vor.u32 %v1443, %v1446
      %v1448 = vrot.slane %v1447, 4
      %v1450 = vshll.u32 %v1294, 16
      %v1452 = vrot.slane %v1450, 5
      %v1453 = vsel %vm446, %v1448, %v1452
      %v1454 = vshrl.u32 %v1294, 16
      %v1456 = vrot.slane %v1454, 4
      %v1457 = vor.u32 %v1456, %v1452
      %v1458 = vrot.slane %v1457, 4
      %v1460 = vshll.u32 %v1295, 16
      %v1462 = vrot.slane %v1460, 5
      %v1463 = vsel %vm446, %v1458, %v1462
      %1478 = vst [vmem:[#allocation2 + $0x1c] sm:$0xf] %v1309
      %1479 = vst [vmem:[#allocation2 + $0x40] sm:$0xf] %v1319
      %1480 = vst [vmem:[#allocation2 + $0x64] sm:$0xf] %v1333
      %1481 = vst [vmem:[#allocation2 + $0x88] sm:$0xf] %v1343
      %1482 = vst [vmem:[#allocation2 + $0xac] sm:$0xf] %v1357
      %1483 = vst [vmem:[#allocation2 + $0xd0] sm:$0xf] %v1367
      %1484 = vst [vmem:[#allocation2 + $0xf4] sm:$0xf] %v1381
      %1485 = vst [vmem:[#allocation2 + $0x118] sm:$0xf] %v1391
      %1486 = vst [vmem:[#allocation2 + $0x13c] sm:$0xf] %v1405
      %1487 = vst [vmem:[#allocation2 + $0x160] sm:$0xf] %v1415
      %1488 = vst [vmem:[#allocation2 + $0x184] sm:$0xf] %v1429
      %1489 = vst [vmem:[#allocation2 + $0x1a8] sm:$0xf] %v1439
      %1490 = vst [vmem:[#allocation2 + $0x1cc] sm:$0xf] %v1453
      %1491 = vst [vmem:[#allocation2 + $0x1f0] sm:$0xf] %v1463
      %v1493 = vshrl.u32 %v411, 16
      %v1495 = vrot.slane %v1493, 4
      %v1496 = vshll.u32 %v411, 16
      %v1498 = vrot.slane %v1496, 5
      %v1499 = vor.u32 %v1495, %v1498
      %v1500 = vrot.slane %v1499, 4
      %v1502 = vshll.u32 %v412, 16
      %v1504 = vrot.slane %v1502, 5
      %v1505 = vsel %vm446, %v1500, %v1504
      %v1506 = vshrl.u32 %v412, 16
      %v1508 = vrot.slane %v1506, 4
      %v1509 = vor.u32 %v1508, %v1504
      %v1510 = vrot.slane %v1509, 4
      %v1512 = vshll.u32 %v413, 16
      %v1514 = vrot.slane %v1512, 5
      %v1515 = vsel %vm446, %v1510, %v1514
      %1518 = vst [vmem:[#allocation2 + $0x214] sm:$0xf] %v1505
      %1519 = vst [vmem:[#allocation2 + $0x238] sm:$0xf] %v1515
      %v1520 = vld [vmem:[%s1244] sm:$0xe]
      %v1521 = vld [vmem:[%s1244 + $0x4] sm:$0xf]
      %v1522 = vld [vmem:[%s1244 + $0x8] sm:$0x1]
      %v1523 = vld [vmem:[%s1244 + $0xc] sm:$0xe]
      %v1524 = vld [vmem:[%s1244 + $0x10] sm:$0xf]
      %v1525 = vld [vmem:[%s1244 + $0x14] sm:$0x1]
      %v1526 = vld [vmem:[%s1244 + $0x18] sm:$0xe]
      %v1527 = vld [vmem:[%s1244 + $0x1c] sm:$0xf]
      %v1528 = vld [vmem:[%s1244 + $0x20] sm:$0x1]
      %v1529 = vld [vmem:[%s1244 + $0x24] sm:$0xe]
      %v1530 = vld [vmem:[%s1244 + $0x28] sm:$0xf]
      %v1531 = vld [vmem:[%s1244 + $0x2c] sm:$0x1]
      %v1532 = vld [vmem:[%s1244 + $0x30] sm:$0xe]
      %v1533 = vld [vmem:[%s1244 + $0x34] sm:$0xf]
      %v1534 = vld [vmem:[%s1244 + $0x38] sm:$0x1]
      %v1535 = vld [vmem:[%s1244 + $0x3c] sm:$0xe]
      %v1536 = vld [vmem:[%s1244 + $0x40] sm:$0xf]
      %v1537 = vld [vmem:[%s1244 + $0x44] sm:$0x1]
      %v1538 = vld [vmem:[%s1244 + $0x48] sm:$0xe]
      %v1539 = vld [vmem:[%s1244 + $0x4c] sm:$0xf]
      %v1540 = vld [vmem:[%s1244 + $0x50] sm:$0x1]
      %v1562 = vrot.slane %v1520, 5
      %v1563 = vrot.slane %v1562, 4
      %v1564 = vrot.slane %v1521, 5
      %v1565 = vsel %vm697, %v1563, %v1564
      %v1566 = vrot.slane %v1564, 4
      %v1567 = vrot.slane %v1522, 5
      %v1568 = vsel %vm697, %v1566, %v1567
      %v1569 = vrot.slane %v1523, 5
      %v1570 = vrot.slane %v1569, 4
      %v1571 = vrot.slane %v1524, 5
      %v1572 = vsel %vm697, %v1570, %v1571
      %v1573 = vrot.slane %v1571, 4
      %v1574 = vrot.slane %v1525, 5
      %v1575 = vsel %vm697, %v1573, %v1574
      %v1576 = vrot.slane %v1526, 5
      %v1577 = vrot.slane %v1576, 4
      %v1578 = vrot.slane %v1527, 5
      %v1579 = vsel %vm697, %v1577, %v1578
      %v1580 = vrot.slane %v1578, 4
      %v1581 = vrot.slane %v1528, 5
      %v1582 = vsel %vm697, %v1580, %v1581
      %v1583 = vrot.slane %v1529, 5
      %v1584 = vrot.slane %v1583, 4
      %v1585 = vrot.slane %v1530, 5
      %v1586 = vsel %vm697, %v1584, %v1585
      %v1587 = vrot.slane %v1585, 4
      %v1588 = vrot.slane %v1531, 5
      %v1589 = vsel %vm697, %v1587, %v1588
      %v1590 = vrot.slane %v1532, 5
      %v1591 = vrot.slane %v1590, 4
      %v1592 = vrot.slane %v1533, 5
      %v1593 = vsel %vm697, %v1591, %v1592
      %v1594 = vrot.slane %v1592, 4
      %v1595 = vrot.slane %v1534, 5
      %v1596 = vsel %vm697, %v1594, %v1595
      %v1597 = vrot.slane %v1535, 5
      %v1598 = vrot.slane %v1597, 4
      %v1599 = vrot.slane %v1536, 5
      %v1600 = vsel %vm697, %v1598, %v1599
      %v1601 = vrot.slane %v1599, 4
      %v1602 = vrot.slane %v1537, 5
      %v1603 = vsel %vm697, %v1601, %v1602
      %v1604 = vrot.slane %v1538, 5
      %v1605 = vrot.slane %v1604, 4
      %v1606 = vrot.slane %v1539, 5
      %v1607 = vsel %vm697, %v1605, %v1606
      %v1608 = vrot.slane %v1606, 4
      %v1609 = vrot.slane %v1540, 5
      %v1610 = vsel %vm697, %v1608, %v1609
      %1625 = vst [vmem:[#allocation2 + $0x20] sm:$0xf] %v1565
      %1626 = vst [vmem:[#allocation2 + $0x44] sm:$0xf] %v1568
      %1627 = vst [vmem:[#allocation2 + $0x68] sm:$0xf] %v1572
      %1628 = vst [vmem:[#allocation2 + $0x8c] sm:$0xf] %v1575
      %1629 = vst [vmem:[#allocation2 + $0xb0] sm:$0xf] %v1579
      %1630 = vst [vmem:[#allocation2 + $0xd4] sm:$0xf] %v1582
      %1631 = vst [vmem:[#allocation2 + $0xf8] sm:$0xf] %v1586
      %1632 = vst [vmem:[#allocation2 + $0x11c] sm:$0xf] %v1589
      %1633 = vst [vmem:[#allocation2 + $0x140] sm:$0xf] %v1593
      %1634 = vst [vmem:[#allocation2 + $0x164] sm:$0xf] %v1596
      %1635 = vst [vmem:[#allocation2 + $0x188] sm:$0xf] %v1600
      %1636 = vst [vmem:[#allocation2 + $0x1ac] sm:$0xf] %v1603
      %1637 = vst [vmem:[#allocation2 + $0x1d0] sm:$0xf] %v1607
      %1638 = vst [vmem:[#allocation2 + $0x1f4] sm:$0xf] %v1610
      %v1642 = vrot.slane %v411, 5
      %v1643 = vrot.slane %v1642, 4
      %v1644 = vrot.slane %v412, 5
      %v1645 = vsel %vm697, %v1643, %v1644
      %v1646 = vrot.slane %v1644, 4
      %v1647 = vrot.slane %v413, 5
      %v1648 = vsel %vm697, %v1646, %v1647
      %1651 = vst [vmem:[#allocation2 + $0x218] sm:$0xf] %v1645
      %1652 = vst [vmem:[#allocation2 + $0x23c] sm:$0xf] %v1648
      %v1653 = vld [vmem:[#allocation2] sm:$0xff]
      %v1654 = vld [vmem:[#allocation2 + $0x8] sm:$0xff]
      %v1655 = vld [vmem:[#allocation2 + $0x10] sm:$0xff]
      %v1656 = vld [vmem:[#allocation2 + $0x18] sm:$0xff]
      %v1657 = vld [vmem:[#allocation2 + $0x20] sm:$0xf]
      %v1658 = vld [vmem:[#allocation2 + $0x24] sm:$0xff]
      %v1659 = vld [vmem:[#allocation2 + $0x2c] sm:$0xff]
      %v1660 = vld [vmem:[#allocation2 + $0x34] sm:$0xff]
      %v1661 = vld [vmem:[#allocation2 + $0x3c] sm:$0xff]
      %v1662 = vld [vmem:[#allocation2 + $0x44] sm:$0xf]
      %v1663 = vld [vmem:[#allocation2 + $0x48] sm:$0xff]
      %v1664 = vld [vmem:[#allocation2 + $0x50] sm:$0xff]
      %v1665 = vld [vmem:[#allocation2 + $0x58] sm:$0xff]
      %v1666 = vld [vmem:[#allocation2 + $0x60] sm:$0xff]
      %v1667 = vld [vmem:[#allocation2 + $0x68] sm:$0xf]
      %v1668 = vld [vmem:[#allocation2 + $0x6c] sm:$0xff]
      %v1669 = vld [vmem:[#allocation2 + $0x74] sm:$0xff]
      %v1670 = vld [vmem:[#allocation2 + $0x7c] sm:$0xff]
      %v1671 = vld [vmem:[#allocation2 + $0x84] sm:$0xff]
      %v1672 = vld [vmem:[#allocation2 + $0x8c] sm:$0xf]
      %v1673 = vld [vmem:[#allocation2 + $0x90] sm:$0xff]
      %v1674 = vld [vmem:[#allocation2 + $0x98] sm:$0xff]
      %v1675 = vld [vmem:[#allocation2 + $0xa0] sm:$0xff]
      %v1676 = vld [vmem:[#allocation2 + $0xa8] sm:$0xff]
      %v1677 = vld [vmem:[#allocation2 + $0xb0] sm:$0xf]
      %v1678 = vld [vmem:[#allocation2 + $0xb4] sm:$0xff]
      %v1679 = vld [vmem:[#allocation2 + $0xbc] sm:$0xff]
      %v1680 = vld [vmem:[#allocation2 + $0xc4] sm:$0xff]
      %v1681 = vld [vmem:[#allocation2 + $0xcc] sm:$0xff]
      %v1682 = vld [vmem:[#allocation2 + $0xd4] sm:$0xf]
      %v1683 = vld [vmem:[#allocation2 + $0xd8] sm:$0xff]
      %v1684 = vld [vmem:[#allocation2 + $0xe0] sm:$0xff]
      %v1685 = vld [vmem:[#allocation2 + $0xe8] sm:$0xff]
      %v1686 = vld [vmem:[#allocation2 + $0xf0] sm:$0xff]
      %v1687 = vld [vmem:[#allocation2 + $0xf8] sm:$0xf]
      %v1688 = vld [vmem:[#allocation2 + $0xfc] sm:$0xff]
      %v1689 = vld [vmem:[#allocation2 + $0x104] sm:$0xff]
      %v1690 = vld [vmem:[#allocation2 + $0x10c] sm:$0xff]
      %v1691 = vld [vmem:[#allocation2 + $0x114] sm:$0xff]
      %v1692 = vld [vmem:[#allocation2 + $0x11c] sm:$0xf]
      %v1693 = vld [vmem:[#allocation2 + $0x120] sm:$0xff]
      %v1694 = vld [vmem:[#allocation2 + $0x128] sm:$0xff]
      %v1695 = vld [vmem:[#allocation2 + $0x130] sm:$0xff]
      %v1696 = vld [vmem:[#allocation2 + $0x138] sm:$0xff]
      %v1697 = vld [vmem:[#allocation2 + $0x140] sm:$0xf]
      %v1698 = vld [vmem:[#allocation2 + $0x144] sm:$0xff]
      %v1699 = vld [vmem:[#allocation2 + $0x14c] sm:$0xff]
      %v1700 = vld [vmem:[#allocation2 + $0x154] sm:$0xff]
      %v1701 = vld [vmem:[#allocation2 + $0x15c] sm:$0xff]
      %v1702 = vld [vmem:[#allocation2 + $0x164] sm:$0xf]
      %v1703 = vld [vmem:[#allocation2 + $0x168] sm:$0xff]
      %v1704 = vld [vmem:[#allocation2 + $0x170] sm:$0xff]
      %v1705 = vld [vmem:[#allocation2 + $0x178] sm:$0xff]
      %v1706 = vld [vmem:[#allocation2 + $0x180] sm:$0xff]
      %v1707 = vld [vmem:[#allocation2 + $0x188] sm:$0xf]
      %v1708 = vld [vmem:[#allocation2 + $0x18c] sm:$0xff]
      %v1709 = vld [vmem:[#allocation2 + $0x194] sm:$0xff]
      %v1710 = vld [vmem:[#allocation2 + $0x19c] sm:$0xff]
      %v1711 = vld [vmem:[#allocation2 + $0x1a4] sm:$0xff]
      %v1712 = vld [vmem:[#allocation2 + $0x1ac] sm:$0xf]
      %v1713 = vld [vmem:[#allocation2 + $0x1b0] sm:$0xff]
      %v1714 = vld [vmem:[#allocation2 + $0x1b8] sm:$0xff]
      %v1715 = vld [vmem:[#allocation2 + $0x1c0] sm:$0xff]
      %v1716 = vld [vmem:[#allocation2 + $0x1c8] sm:$0xff]
      %v1717 = vld [vmem:[#allocation2 + $0x1d0] sm:$0xf]
      %v1718 = vld [vmem:[#allocation2 + $0x1d4] sm:$0xff]
      %v1719 = vld [vmem:[#allocation2 + $0x1dc] sm:$0xff]
      %v1720 = vld [vmem:[#allocation2 + $0x1e4] sm:$0xff]
      %v1721 = vld [vmem:[#allocation2 + $0x1ec] sm:$0xff]
      %v1722 = vld [vmem:[#allocation2 + $0x1f4] sm:$0xf]
      %v1723 = vld [vmem:[#allocation2 + $0x1f8] sm:$0xff]
      %v1724 = vld [vmem:[#allocation2 + $0x200] sm:$0xff]
      %v1725 = vld [vmem:[#allocation2 + $0x208] sm:$0xff]
      %v1726 = vld [vmem:[#allocation2 + $0x210] sm:$0xff]
      %v1727 = vld [vmem:[#allocation2 + $0x218] sm:$0xf]
      %v1728 = vld [vmem:[#allocation2 + $0x21c] sm:$0xff]
      %v1729 = vld [vmem:[#allocation2 + $0x224] sm:$0xff]
      %v1730 = vld [vmem:[#allocation2 + $0x22c] sm:$0xff]
      %v1731 = vld [vmem:[#allocation2 + $0x234] sm:$0xff]
      %v1732 = vld [vmem:[#allocation2 + $0x23c] sm:$0xf]
      %v1733 = vld [vmem:[%s3] sm:$0xf]
      %v1734 = vld [vmem:[%s3 + $0x4] sm:$0xf]
      %v1735 = vld [vmem:[%s3 + $0x8] sm:$0xf]
      %v1736 = vld [vmem:[%s3 + $0xc] sm:$0xf]
      %v1737 = vld [vmem:[%s3 + $0x10] sm:$0xf]
      %v1738 = vld [vmem:[%s3 + $0x14] sm:$0xf]
      %v1739 = vld [vmem:[%s3 + $0x18] sm:$0xf]
      %v1740 = vld [vmem:[%s3 + $0x1c] sm:$0xf]
      %v1741 = vld [vmem:[%s3 + $0x20] sm:$0xf]
      %v1742 = vld [vmem:[%s3 + $0x24] sm:$0xf]
      %v1743 = vld [vmem:[%s3 + $0x28] sm:$0xf]
      %v1744 = vld [vmem:[%s3 + $0x2c] sm:$0xf]
      %v1745 = vld [vmem:[%s3 + $0x30] sm:$0xf]
      %v1746 = vld [vmem:[%s3 + $0x34] sm:$0xf]
      %v1747 = vld [vmem:[%s3 + $0x38] sm:$0xf]
      %v1748 = vld [vmem:[%s3 + $0x3c] sm:$0xf]
      %v1749 = vld [vmem:[%s3 + $0x40] sm:$0xf]
      %v1750 = vld [vmem:[%s3 + $0x44] sm:$0xf]
      %v1751 = vld [vmem:[%s3 + $0x48] sm:$0xf]
      %v1752 = vld [vmem:[%s3 + $0x4c] sm:$0xf]
      %v1753 = vld [vmem:[%s3 + $0x50] sm:$0xf]
      %v1754 = vld [vmem:[%s3 + $0x54] sm:$0xf]
      %v1755 = vld [vmem:[%s3 + $0x58] sm:$0xf]
      %v1756 = vld [vmem:[%s3 + $0x5c] sm:$0xf]
      %v1757 = vld [vmem:[%s3 + $0x60] sm:$0xf]
      %v1758 = vld [vmem:[%s3 + $0x64] sm:$0xf]
      %v1759 = vld [vmem:[%s3 + $0x68] sm:$0xf]
      %v1760 = vld [vmem:[%s3 + $0x6c] sm:$0xf]
      %v1761 = vld [vmem:[%s3 + $0x70] sm:$0xf]
      %v1762 = vld [vmem:[%s3 + $0x74] sm:$0xf]
      %v1763 = vld [vmem:[%s3 + $0x78] sm:$0xf]
      %v1764 = vld [vmem:[%s3 + $0x7c] sm:$0xf]
      %v1765 = vld [vmem:[%s3 + $0x80] sm:$0xf]
      %v1766 = vld [vmem:[%s3 + $0x84] sm:$0xf]
      %v1767 = vld [vmem:[%s3 + $0x88] sm:$0xf]
      %v1768 = vld [vmem:[%s3 + $0x8c] sm:$0xf]
      %v1769 = vld [vmem:[%s3 + $0x90] sm:$0xf]
      %v1770 = vld [vmem:[%s3 + $0x94] sm:$0xf]
      %v1771 = vld [vmem:[%s3 + $0x98] sm:$0xf]
      %v1772 = vld [vmem:[%s3 + $0x9c] sm:$0xf]
      %v1773 = vld [vmem:[%s3 + $0xa0] sm:$0xf]
      %v1774 = vld [vmem:[%s3 + $0xa4] sm:$0xf]
      %v1775 = vld [vmem:[%s3 + $0xa8] sm:$0xf]
      %v1776 = vld [vmem:[%s3 + $0xac] sm:$0xf]
      %v1777 = vld [vmem:[%s3 + $0xb0] sm:$0xf]
      %v1778 = vld [vmem:[%s3 + $0xb4] sm:$0xf]
      %v1779 = vld [vmem:[%s3 + $0xb8] sm:$0xf]
      %v1780 = vld [vmem:[%s3 + $0xbc] sm:$0xf]
      %v1781 = vld [vmem:[%s3 + $0xc0] sm:$0xf]
      %v1782 = vld [vmem:[%s3 + $0xc4] sm:$0xf]
      %v1783 = vld [vmem:[%s3 + $0xc8] sm:$0xf]
      %v1784 = vld [vmem:[%s3 + $0xcc] sm:$0xf]
      %v1785 = vld [vmem:[%s3 + $0xd0] sm:$0xf]
      %v1786 = vld [vmem:[%s3 + $0xd4] sm:$0xf]
      %v1787 = vld [vmem:[%s3 + $0xd8] sm:$0xf]
      %v1788 = vld [vmem:[%s3 + $0xdc] sm:$0xf]
      %v1789 = vld [vmem:[%s3 + $0xe0] sm:$0xf]
      %v1790 = vld [vmem:[%s3 + $0xe4] sm:$0xf]
      %v1791 = vld [vmem:[%s3 + $0xe8] sm:$0xf]
      %v1792 = vld [vmem:[%s3 + $0xec] sm:$0xf]
      %v1793 = vld [vmem:[%s3 + $0xf0] sm:$0xf]
      %v1794 = vld [vmem:[%s3 + $0xf4] sm:$0xf]
      %v1795 = vld [vmem:[%s3 + $0xf8] sm:$0xf]
      %v1796 = vld [vmem:[%s3 + $0xfc] sm:$0xf]
      %v1797 = vld [vmem:[%s3 + $0x100] sm:$0xf]
      %v1798 = vld [vmem:[%s3 + $0x104] sm:$0xf]
      %v1799 = vld [vmem:[%s3 + $0x108] sm:$0xf]
      %v1800 = vld [vmem:[%s3 + $0x10c] sm:$0xf]
      %v1801 = vld [vmem:[%s3 + $0x110] sm:$0xf]
      %v1802 = vld [vmem:[%s3 + $0x114] sm:$0xf]
      %v1803 = vld [vmem:[%s3 + $0x118] sm:$0xf]
      %v1804 = vld [vmem:[%s3 + $0x11c] sm:$0xf]
      %v1805 = vld [vmem:[%s3 + $0x120] sm:$0xf]
      %v1806 = vld [vmem:[%s3 + $0x124] sm:$0xf]
      %v1807 = vld [vmem:[%s3 + $0x128] sm:$0xf]
      %v1808 = vld [vmem:[%s3 + $0x12c] sm:$0xf]
      %v1809 = vld [vmem:[%s3 + $0x130] sm:$0xf]
      %v1810 = vld [vmem:[%s3 + $0x134] sm:$0xf]
      %v1811 = vld [vmem:[%s3 + $0x138] sm:$0xf]
      %v1812 = vld [vmem:[%s3 + $0x13c] sm:$0xf]
      %v1813 = vld [vmem:[%s3 + $0x140] sm:$0xf]
      %v1814 = vld [vmem:[%s3 + $0x144] sm:$0xf]
      %v1815 = vld [vmem:[%s3 + $0x148] sm:$0xf]
      %v1816 = vld [vmem:[%s3 + $0x14c] sm:$0xf]
      %v1817 = vld [vmem:[%s3 + $0x150] sm:$0xf]
      %v1818 = vld [vmem:[%s3 + $0x154] sm:$0xf]
      %v1819 = vld [vmem:[%s3 + $0x158] sm:$0xf]
      %v1820 = vld [vmem:[%s3 + $0x15c] sm:$0xf]
      %v1821 = vld [vmem:[%s3 + $0x160] sm:$0xf]
      %v1822 = vld [vmem:[%s3 + $0x164] sm:$0xf]
      %v1823 = vld [vmem:[%s3 + $0x168] sm:$0xf]
      %v1824 = vld [vmem:[%s3 + $0x16c] sm:$0xf]
      %v1825 = vld [vmem:[%s3 + $0x170] sm:$0xf]
      %v1826 = vld [vmem:[%s3 + $0x174] sm:$0xf]
      %v1827 = vld [vmem:[%s3 + $0x178] sm:$0xf]
      %v1828 = vld [vmem:[%s3 + $0x17c] sm:$0xf]
      %v1829 = vld [vmem:[%s3 + $0x180] sm:$0xf]
      %v1830 = vld [vmem:[%s3 + $0x184] sm:$0xf]
      %v1831 = vld [vmem:[%s3 + $0x188] sm:$0xf]
      %v1832 = vld [vmem:[%s3 + $0x18c] sm:$0xf]
      %v1833 = vld [vmem:[%s3 + $0x190] sm:$0xf]
      %v1834 = vld [vmem:[%s3 + $0x194] sm:$0xf]
      %v1835 = vld [vmem:[%s3 + $0x198] sm:$0xf]
      %v1836 = vld [vmem:[%s3 + $0x19c] sm:$0xf]
      %v1837 = vld [vmem:[%s3 + $0x1a0] sm:$0xf]
      %v1838 = vld [vmem:[%s3 + $0x1a4] sm:$0xf]
      %v1839 = vld [vmem:[%s3 + $0x1a8] sm:$0xf]
      %v1840 = vld [vmem:[%s3 + $0x1ac] sm:$0xf]
      %v1841 = vld [vmem:[%s3 + $0x1b0] sm:$0xf]
      %v1842 = vld [vmem:[%s3 + $0x1b4] sm:$0xf]
      %v1843 = vld [vmem:[%s3 + $0x1b8] sm:$0xf]
      %v1844 = vld [vmem:[%s3 + $0x1bc] sm:$0xf]
      %v1845 = vld [vmem:[%s3 + $0x1c0] sm:$0xf]
      %v1846 = vld [vmem:[%s3 + $0x1c4] sm:$0xf]
      %v1847 = vld [vmem:[%s3 + $0x1c8] sm:$0xf]
      %v1848 = vld [vmem:[%s3 + $0x1cc] sm:$0xf]
      %v1849 = vld [vmem:[%s3 + $0x1d0] sm:$0xf]
      %v1850 = vld [vmem:[%s3 + $0x1d4] sm:$0xf]
      %v1851 = vld [vmem:[%s3 + $0x1d8] sm:$0xf]
      %v1852 = vld [vmem:[%s3 + $0x1dc] sm:$0xf]
      %v1853 = vld [vmem:[%s3 + $0x1e0] sm:$0xf]
      %v1854 = vld [vmem:[%s3 + $0x1e4] sm:$0xf]
      %v1855 = vld [vmem:[%s3 + $0x1e8] sm:$0xf]
      %v1856 = vld [vmem:[%s3 + $0x1ec] sm:$0xf]
      %v1857 = vld [vmem:[%s3 + $0x1f0] sm:$0xf]
      %v1858 = vld [vmem:[%s3 + $0x1f4] sm:$0xf]
      %v1859 = vld [vmem:[%s3 + $0x1f8] sm:$0xf]
      %v1860 = vld [vmem:[%s3 + $0x1fc] sm:$0xf]
      %v1861 = vld [vmem:[%s3 + $0x200] sm:$0xf]
      %v1862 = vld [vmem:[%s3 + $0x204] sm:$0xf]
      %v1863 = vld [vmem:[%s3 + $0x208] sm:$0xf]
      %v1864 = vld [vmem:[%s3 + $0x20c] sm:$0xf]
      %v1865 = vld [vmem:[%s3 + $0x210] sm:$0xf]
      %v1866 = vld [vmem:[%s3 + $0x214] sm:$0xf]
      %v1867 = vld [vmem:[%s3 + $0x218] sm:$0xf]
      %v1868 = vld [vmem:[%s3 + $0x21c] sm:$0xf]
      %v1869 = vld [vmem:[%s3 + $0x220] sm:$0xf]
      %v1870 = vld [vmem:[%s3 + $0x224] sm:$0xf]
      %v1871 = vld [vmem:[%s3 + $0x228] sm:$0xf]
      %v1872 = vld [vmem:[%s3 + $0x22c] sm:$0xf]
      %v1873 = vld [vmem:[%s3 + $0x230] sm:$0xf]
      %v1874 = vld [vmem:[%s3 + $0x234] sm:$0xf]
      %v1875 = vld [vmem:[%s3 + $0x238] sm:$0xf]
      %v1876 = vld [vmem:[%s3 + $0x23c] sm:$0xf]
      %v1957 = vunpack.c.l.b16 %v1653
      %v1958 = vunpack.c.h.b16 %v1653
      %v1959 = vunpack.c.l.b16 %v1654
      %v1960 = vunpack.c.h.b16 %v1654
      %v1961 = vunpack.c.l.b16 %v1655
      %v1962 = vunpack.c.h.b16 %v1655
      %v1963 = vunpack.c.l.b16 %v1656
      %v1964 = vunpack.c.h.b16 %v1656
      %v1965 = vunpack.c.l.b16 %v1657
      %v1966 = vunpack.c.l.b16 %v1658
      %v1967 = vunpack.c.h.b16 %v1658
      %v1968 = vunpack.c.l.b16 %v1659
      %v1969 = vunpack.c.h.b16 %v1659
      %v1970 = vunpack.c.l.b16 %v1660
      %v1971 = vunpack.c.h.b16 %v1660
      %v1972 = vunpack.c.l.b16 %v1661
      %v1973 = vunpack.c.h.b16 %v1661
      %v1974 = vunpack.c.l.b16 %v1662
      %v1975 = vunpack.c.l.b16 %v1663
      %v1976 = vunpack.c.h.b16 %v1663
      %v1977 = vunpack.c.l.b16 %v1664
      %v1978 = vunpack.c.h.b16 %v1664
      %v1979 = vunpack.c.l.b16 %v1665
      %v1980 = vunpack.c.h.b16 %v1665
      %v1981 = vunpack.c.l.b16 %v1666
      %v1982 = vunpack.c.h.b16 %v1666
      %v1983 = vunpack.c.l.b16 %v1667
      %v1984 = vunpack.c.l.b16 %v1668
      %v1985 = vunpack.c.h.b16 %v1668
      %v1986 = vunpack.c.l.b16 %v1669
      %v1987 = vunpack.c.h.b16 %v1669
      %v1988 = vunpack.c.l.b16 %v1670
      %v1989 = vunpack.c.h.b16 %v1670
      %v1990 = vunpack.c.l.b16 %v1671
      %v1991 = vunpack.c.h.b16 %v1671
      %v1992 = vunpack.c.l.b16 %v1672
      %v1993 = vunpack.c.l.b16 %v1673
      %v1994 = vunpack.c.h.b16 %v1673
      %v1995 = vunpack.c.l.b16 %v1674
      %v1996 = vunpack.c.h.b16 %v1674
      %v1997 = vunpack.c.l.b16 %v1675
      %v1998 = vunpack.c.h.b16 %v1675
      %v1999 = vunpack.c.l.b16 %v1676
      %v2000 = vunpack.c.h.b16 %v1676
      %v2001 = vunpack.c.l.b16 %v1677
      %v2002 = vunpack.c.l.b16 %v1678
      %v2003 = vunpack.c.h.b16 %v1678
      %v2004 = vunpack.c.l.b16 %v1679
      %v2005 = vunpack.c.h.b16 %v1679
      %v2006 = vunpack.c.l.b16 %v1680
      %v2007 = vunpack.c.h.b16 %v1680
      %v2008 = vunpack.c.l.b16 %v1681
      %v2009 = vunpack.c.h.b16 %v1681
      %v2010 = vunpack.c.l.b16 %v1682
      %v2011 = vunpack.c.l.b16 %v1683
      %v2012 = vunpack.c.h.b16 %v1683
      %v2013 = vunpack.c.l.b16 %v1684
      %v2014 = vunpack.c.h.b16 %v1684
      %v2015 = vunpack.c.l.b16 %v1685
      %v2016 = vunpack.c.h.b16 %v1685
      %v2017 = vunpack.c.l.b16 %v1686
      %v2018 = vunpack.c.h.b16 %v1686
      %v2019 = vunpack.c.l.b16 %v1687
      %v2020 = vunpack.c.l.b16 %v1688
      %v2021 = vunpack.c.h.b16 %v1688
      %v2022 = vunpack.c.l.b16 %v1689
      %v2023 = vunpack.c.h.b16 %v1689
      %v2024 = vunpack.c.l.b16 %v1690
      %v2025 = vunpack.c.h.b16 %v1690
      %v2026 = vunpack.c.l.b16 %v1691
      %v2027 = vunpack.c.h.b16 %v1691
      %v2028 = vunpack.c.l.b16 %v1692
      %v2029 = vunpack.c.l.b16 %v1693
      %v2030 = vunpack.c.h.b16 %v1693
      %v2031 = vunpack.c.l.b16 %v1694
      %v2032 = vunpack.c.h.b16 %v1694
      %v2033 = vunpack.c.l.b16 %v1695
      %v2034 = vunpack.c.h.b16 %v1695
      %v2035 = vunpack.c.l.b16 %v1696
      %v2036 = vunpack.c.h.b16 %v1696
      %v2037 = vunpack.c.l.b16 %v1697
      %v2038 = vunpack.c.l.b16 %v1698
      %v2039 = vunpack.c.h.b16 %v1698
      %v2040 = vunpack.c.l.b16 %v1699
      %v2041 = vunpack.c.h.b16 %v1699
      %v2042 = vunpack.c.l.b16 %v1700
      %v2043 = vunpack.c.h.b16 %v1700
      %v2044 = vunpack.c.l.b16 %v1701
      %v2045 = vunpack.c.h.b16 %v1701
      %v2046 = vunpack.c.l.b16 %v1702
      %v2047 = vunpack.c.l.b16 %v1703
      %v2048 = vunpack.c.h.b16 %v1703
      %v2049 = vunpack.c.l.b16 %v1704
      %v2050 = vunpack.c.h.b16 %v1704
      %v2051 = vunpack.c.l.b16 %v1705
      %v2052 = vunpack.c.h.b16 %v1705
      %v2053 = vunpack.c.l.b16 %v1706
      %v2054 = vunpack.c.h.b16 %v1706
      %v2055 = vunpack.c.l.b16 %v1707
      %v2056 = vunpack.c.l.b16 %v1708
      %v2057 = vunpack.c.h.b16 %v1708
      %v2058 = vunpack.c.l.b16 %v1709
      %v2059 = vunpack.c.h.b16 %v1709
      %v2060 = vunpack.c.l.b16 %v1710
      %v2061 = vunpack.c.h.b16 %v1710
      %v2062 = vunpack.c.l.b16 %v1711
      %v2063 = vunpack.c.h.b16 %v1711
      %v2064 = vunpack.c.l.b16 %v1712
      %v2065 = vunpack.c.l.b16 %v1713
      %v2066 = vunpack.c.h.b16 %v1713
      %v2067 = vunpack.c.l.b16 %v1714
      %v2068 = vunpack.c.h.b16 %v1714
      %v2069 = vunpack.c.l.b16 %v1715
      %v2070 = vunpack.c.h.b16 %v1715
      %v2071 = vunpack.c.l.b16 %v1716
      %v2072 = vunpack.c.h.b16 %v1716
      %v2073 = vunpack.c.l.b16 %v1717
      %v2074 = vunpack.c.l.b16 %v1718
      %v2075 = vunpack.c.h.b16 %v1718
      %v2076 = vunpack.c.l.b16 %v1719
      %v2077 = vunpack.c.h.b16 %v1719
      %v2078 = vunpack.c.l.b16 %v1720
      %v2079 = vunpack.c.h.b16 %v1720
      %v2080 = vunpack.c.l.b16 %v1721
      %v2081 = vunpack.c.h.b16 %v1721
      %v2082 = vunpack.c.l.b16 %v1722
      %v2083 = vunpack.c.l.b16 %v1723
      %v2084 = vunpack.c.h.b16 %v1723
      %v2085 = vunpack.c.l.b16 %v1724
      %v2086 = vunpack.c.h.b16 %v1724
      %v2087 = vunpack.c.l.b16 %v1725
      %v2088 = vunpack.c.h.b16 %v1725
      %v2089 = vunpack.c.l.b16 %v1726
      %v2090 = vunpack.c.h.b16 %v1726
      %v2091 = vunpack.c.l.b16 %v1727
      %v2092 = vunpack.c.l.b16 %v1728
      %v2093 = vunpack.c.h.b16 %v1728
      %v2094 = vunpack.c.l.b16 %v1729
      %v2095 = vunpack.c.h.b16 %v1729
      %v2096 = vunpack.c.l.b16 %v1730
      %v2097 = vunpack.c.h.b16 %v1730
      %v2098 = vunpack.c.l.b16 %v1731
      %v2099 = vunpack.c.h.b16 %v1731
      %v2100 = vunpack.c.l.b16 %v1732
      %v2101 = vpack.c.b16 %v1966, %v1957
      %v2102 = vpack.c.b16 %v1967, %v1958
      %v2103 = vpack.c.b16 %v1968, %v1959
      %v2104 = vpack.c.b16 %v1969, %v1960
      %v2105 = vpack.c.b16 %v1970, %v1961
      %v2106 = vpack.c.b16 %v1971, %v1962
      %v2107 = vpack.c.b16 %v1972, %v1963
      %v2108 = vpack.c.b16 %v1973, %v1964
      %v2109 = vpack.c.b16 %v1974, %v1965
      %v2110 = vpack.c.b16 %v1984, %v1975
      %v2111 = vpack.c.b16 %v1985, %v1976
      %v2112 = vpack.c.b16 %v1986, %v1977
      %v2113 = vpack.c.b16 %v1987, %v1978
      %v2114 = vpack.c.b16 %v1988, %v1979
      %v2115 = vpack.c.b16 %v1989, %v1980
      %v2116 = vpack.c.b16 %v1990, %v1981
      %v2117 = vpack.c.b16 %v1991, %v1982
      %v2118 = vpack.c.b16 %v1992, %v1983
      %v2119 = vpack.c.b16 %v2002, %v1993
      %v2120 = vpack.c.b16 %v2003, %v1994
      %v2121 = vpack.c.b16 %v2004, %v1995
      %v2122 = vpack.c.b16 %v2005, %v1996
      %v2123 = vpack.c.b16 %v2006, %v1997
      %v2124 = vpack.c.b16 %v2007, %v1998
      %v2125 = vpack.c.b16 %v2008, %v1999
      %v2126 = vpack.c.b16 %v2009, %v2000
      %v2127 = vpack.c.b16 %v2010, %v2001
      %v2128 = vpack.c.b16 %v2020, %v2011
      %v2129 = vpack.c.b16 %v2021, %v2012
      %v2130 = vpack.c.b16 %v2022, %v2013
      %v2131 = vpack.c.b16 %v2023, %v2014
      %v2132 = vpack.c.b16 %v2024, %v2015
      %v2133 = vpack.c.b16 %v2025, %v2016
      %v2134 = vpack.c.b16 %v2026, %v2017
      %v2135 = vpack.c.b16 %v2027, %v2018
      %v2136 = vpack.c.b16 %v2028, %v2019
      %v2137 = vpack.c.b16 %v2038, %v2029
      %v2138 = vpack.c.b16 %v2039, %v2030
      %v2139 = vpack.c.b16 %v2040, %v2031
      %v2140 = vpack.c.b16 %v2041, %v2032
      %v2141 = vpack.c.b16 %v2042, %v2033
      %v2142 = vpack.c.b16 %v2043, %v2034
      %v2143 = vpack.c.b16 %v2044, %v2035
      %v2144 = vpack.c.b16 %v2045, %v2036
      %v2145 = vpack.c.b16 %v2046, %v2037
      %v2146 = vpack.c.b16 %v2056, %v2047
      %v2147 = vpack.c.b16 %v2057, %v2048
      %v2148 = vpack.c.b16 %v2058, %v2049
      %v2149 = vpack.c.b16 %v2059, %v2050
      %v2150 = vpack.c.b16 %v2060, %v2051
      %v2151 = vpack.c.b16 %v2061, %v2052
      %v2152 = vpack.c.b16 %v2062, %v2053
      %v2153 = vpack.c.b16 %v2063, %v2054
      %v2154 = vpack.c.b16 %v2064, %v2055
      %v2155 = vpack.c.b16 %v2074, %v2065
      %v2156 = vpack.c.b16 %v2075, %v2066
      %v2157 = vpack.c.b16 %v2076, %v2067
      %v2158 = vpack.c.b16 %v2077, %v2068
      %v2159 = vpack.c.b16 %v2078, %v2069
      %v2160 = vpack.c.b16 %v2079, %v2070
      %v2161 = vpack.c.b16 %v2080, %v2071
      %v2162 = vpack.c.b16 %v2081, %v2072
      %v2163 = vpack.c.b16 %v2082, %v2073
      %v2164 = vpack.c.b16 %v2092, %v2083
      %v2165 = vpack.c.b16 %v2093, %v2084
      %v2166 = vpack.c.b16 %v2094, %v2085
      %v2167 = vpack.c.b16 %v2095, %v2086
      %v2168 = vpack.c.b16 %v2096, %v2087
      %v2169 = vpack.c.b16 %v2097, %v2088
      %v2170 = vpack.c.b16 %v2098, %v2089
      %v2171 = vpack.c.b16 %v2099, %v2090
      %v2172 = vpack.c.b16 %v2100, %v2091
      %v2389 = vunpack.c.l.b16 %v1733
      %v2390 = vunpack.c.l.b16 %v1734
      %v2391 = vunpack.c.l.b16 %v1735
      %v2392 = vunpack.c.l.b16 %v1736
      %v2393 = vunpack.c.l.b16 %v1737
      %v2394 = vunpack.c.l.b16 %v1738
      %v2395 = vunpack.c.l.b16 %v1739
      %v2396 = vunpack.c.l.b16 %v1740
      %v2397 = vunpack.c.l.b16 %v1741
      %v2398 = vunpack.c.l.b16 %v1742
      %v2399 = vunpack.c.l.b16 %v1743
      %v2400 = vunpack.c.l.b16 %v1744
      %v2401 = vunpack.c.l.b16 %v1745
      %v2402 = vunpack.c.l.b16 %v1746
      %v2403 = vunpack.c.l.b16 %v1747
      %v2404 = vunpack.c.l.b16 %v1748
      %v2405 = vunpack.c.l.b16 %v1749
      %v2406 = vunpack.c.l.b16 %v1750
      %v2407 = vunpack.c.l.b16 %v1751
      %v2408 = vunpack.c.l.b16 %v1752
      %v2409 = vunpack.c.l.b16 %v1753
      %v2410 = vunpack.c.l.b16 %v1754
      %v2411 = vunpack.c.l.b16 %v1755
      %v2412 = vunpack.c.l.b16 %v1756
      %v2413 = vunpack.c.l.b16 %v1757
      %v2414 = vunpack.c.l.b16 %v1758
      %v2415 = vunpack.c.l.b16 %v1759
      %v2416 = vunpack.c.l.b16 %v1760
      %v2417 = vunpack.c.l.b16 %v1761
      %v2418 = vunpack.c.l.b16 %v1762
      %v2419 = vunpack.c.l.b16 %v1763
      %v2420 = vunpack.c.l.b16 %v1764
      %v2421 = vunpack.c.l.b16 %v1765
      %v2422 = vunpack.c.l.b16 %v1766
      %v2423 = vunpack.c.l.b16 %v1767
      %v2424 = vunpack.c.l.b16 %v1768
      %v2425 = vunpack.c.l.b16 %v1769
      %v2426 = vunpack.c.l.b16 %v1770
      %v2427 = vunpack.c.l.b16 %v1771
      %v2428 = vunpack.c.l.b16 %v1772
      %v2429 = vunpack.c.l.b16 %v1773
      %v2430 = vunpack.c.l.b16 %v1774
      %v2431 = vunpack.c.l.b16 %v1775
      %v2432 = vunpack.c.l.b16 %v1776
      %v2433 = vunpack.c.l.b16 %v1777
      %v2434 = vunpack.c.l.b16 %v1778
      %v2435 = vunpack.c.l.b16 %v1779
      %v2436 = vunpack.c.l.b16 %v1780
      %v2437 = vunpack.c.l.b16 %v1781
      %v2438 = vunpack.c.l.b16 %v1782
      %v2439 = vunpack.c.l.b16 %v1783
      %v2440 = vunpack.c.l.b16 %v1784
      %v2441 = vunpack.c.l.b16 %v1785
      %v2442 = vunpack.c.l.b16 %v1786
      %v2443 = vunpack.c.l.b16 %v1787
      %v2444 = vunpack.c.l.b16 %v1788
      %v2445 = vunpack.c.l.b16 %v1789
      %v2446 = vunpack.c.l.b16 %v1790
      %v2447 = vunpack.c.l.b16 %v1791
      %v2448 = vunpack.c.l.b16 %v1792
      %v2449 = vunpack.c.l.b16 %v1793
      %v2450 = vunpack.c.l.b16 %v1794
      %v2451 = vunpack.c.l.b16 %v1795
      %v2452 = vunpack.c.l.b16 %v1796
      %v2453 = vunpack.c.l.b16 %v1797
      %v2454 = vunpack.c.l.b16 %v1798
      %v2455 = vunpack.c.l.b16 %v1799
      %v2456 = vunpack.c.l.b16 %v1800
      %v2457 = vunpack.c.l.b16 %v1801
      %v2458 = vunpack.c.l.b16 %v1802
      %v2459 = vunpack.c.l.b16 %v1803
      %v2460 = vunpack.c.l.b16 %v1804
      %v2461 = vunpack.c.l.b16 %v1805
      %v2462 = vunpack.c.l.b16 %v1806
      %v2463 = vunpack.c.l.b16 %v1807
      %v2464 = vunpack.c.l.b16 %v1808
      %v2465 = vunpack.c.l.b16 %v1809
      %v2466 = vunpack.c.l.b16 %v1810
      %v2467 = vunpack.c.l.b16 %v1811
      %v2468 = vunpack.c.l.b16 %v1812
      %v2469 = vunpack.c.l.b16 %v1813
      %v2470 = vunpack.c.l.b16 %v1814
      %v2471 = vunpack.c.l.b16 %v1815
      %v2472 = vunpack.c.l.b16 %v1816
      %v2473 = vunpack.c.l.b16 %v1817
      %v2474 = vunpack.c.l.b16 %v1818
      %v2475 = vunpack.c.l.b16 %v1819
      %v2476 = vunpack.c.l.b16 %v1820
      %v2477 = vunpack.c.l.b16 %v1821
      %v2478 = vunpack.c.l.b16 %v1822
      %v2479 = vunpack.c.l.b16 %v1823
      %v2480 = vunpack.c.l.b16 %v1824
      %v2481 = vunpack.c.l.b16 %v1825
      %v2482 = vunpack.c.l.b16 %v1826
      %v2483 = vunpack.c.l.b16 %v1827
      %v2484 = vunpack.c.l.b16 %v1828
      %v2485 = vunpack.c.l.b16 %v1829
      %v2486 = vunpack.c.l.b16 %v1830
      %v2487 = vunpack.c.l.b16 %v1831
      %v2488 = vunpack.c.l.b16 %v1832
      %v2489 = vunpack.c.l.b16 %v1833
      %v2490 = vunpack.c.l.b16 %v1834
      %v2491 = vunpack.c.l.b16 %v1835
      %v2492 = vunpack.c.l.b16 %v1836
      %v2493 = vunpack.c.l.b16 %v1837
      %v2494 = vunpack.c.l.b16 %v1838
      %v2495 = vunpack.c.l.b16 %v1839
      %v2496 = vunpack.c.l.b16 %v1840
      %v2497 = vunpack.c.l.b16 %v1841
      %v2498 = vunpack.c.l.b16 %v1842
      %v2499 = vunpack.c.l.b16 %v1843
      %v2500 = vunpack.c.l.b16 %v1844
      %v2501 = vunpack.c.l.b16 %v1845
      %v2502 = vunpack.c.l.b16 %v1846
      %v2503 = vunpack.c.l.b16 %v1847
      %v2504 = vunpack.c.l.b16 %v1848
      %v2505 = vunpack.c.l.b16 %v1849
      %v2506 = vunpack.c.l.b16 %v1850
      %v2507 = vunpack.c.l.b16 %v1851
      %v2508 = vunpack.c.l.b16 %v1852
      %v2509 = vunpack.c.l.b16 %v1853
      %v2510 = vunpack.c.l.b16 %v1854
      %v2511 = vunpack.c.l.b16 %v1855
      %v2512 = vunpack.c.l.b16 %v1856
      %v2513 = vunpack.c.l.b16 %v1857
      %v2514 = vunpack.c.l.b16 %v1858
      %v2515 = vunpack.c.l.b16 %v1859
      %v2516 = vunpack.c.l.b16 %v1860
      %v2517 = vunpack.c.l.b16 %v1861
      %v2518 = vunpack.c.l.b16 %v1862
      %v2519 = vunpack.c.l.b16 %v1863
      %v2520 = vunpack.c.l.b16 %v1864
      %v2521 = vunpack.c.l.b16 %v1865
      %v2522 = vunpack.c.l.b16 %v1866
      %v2523 = vunpack.c.l.b16 %v1867
      %v2524 = vunpack.c.l.b16 %v1868
      %v2525 = vunpack.c.l.b16 %v1869
      %v2526 = vunpack.c.l.b16 %v1870
      %v2527 = vunpack.c.l.b16 %v1871
      %v2528 = vunpack.c.l.b16 %v1872
      %v2529 = vunpack.c.l.b16 %v1873
      %v2530 = vunpack.c.l.b16 %v1874
      %v2531 = vunpack.c.l.b16 %v1875
      %v2532 = vunpack.c.l.b16 %v1876
      %v2533 = vpack.c.b16 %v2390, %v2389
      %v2534 = vpack.c.b16 %v2392, %v2391
      %v2535 = vpack.c.b16 %v2394, %v2393
      %v2536 = vpack.c.b16 %v2396, %v2395
      %v2537 = vpack.c.b16 %v2398, %v2397
      %v2538 = vpack.c.b16 %v2400, %v2399
      %v2539 = vpack.c.b16 %v2402, %v2401
      %v2540 = vpack.c.b16 %v2404, %v2403
      %v2541 = vpack.c.b16 %v2406, %v2405
      %v2542 = vpack.c.b16 %v2408, %v2407
      %v2543 = vpack.c.b16 %v2410, %v2409
      %v2544 = vpack.c.b16 %v2412, %v2411
      %v2545 = vpack.c.b16 %v2414, %v2413
      %v2546 = vpack.c.b16 %v2416, %v2415
      %v2547 = vpack.c.b16 %v2418, %v2417
      %v2548 = vpack.c.b16 %v2420, %v2419
      %v2549 = vpack.c.b16 %v2422, %v2421
      %v2550 = vpack.c.b16 %v2424, %v2423
      %v2551 = vpack.c.b16 %v2426, %v2425
      %v2552 = vpack.c.b16 %v2428, %v2427
      %v2553 = vpack.c.b16 %v2430, %v2429
      %v2554 = vpack.c.b16 %v2432, %v2431
      %v2555 = vpack.c.b16 %v2434, %v2433
      %v2556 = vpack.c.b16 %v2436, %v2435
      %v2557 = vpack.c.b16 %v2438, %v2437
      %v2558 = vpack.c.b16 %v2440, %v2439
      %v2559 = vpack.c.b16 %v2442, %v2441
      %v2560 = vpack.c.b16 %v2444, %v2443
      %v2561 = vpack.c.b16 %v2446, %v2445
      %v2562 = vpack.c.b16 %v2448, %v2447
      %v2563 = vpack.c.b16 %v2450, %v2449
      %v2564 = vpack.c.b16 %v2452, %v2451
      %v2565 = vpack.c.b16 %v2454, %v2453
      %v2566 = vpack.c.b16 %v2456, %v2455
      %v2567 = vpack.c.b16 %v2458, %v2457
      %v2568 = vpack.c.b16 %v2460, %v2459
      %v2569 = vpack.c.b16 %v2462, %v2461
      %v2570 = vpack.c.b16 %v2464, %v2463
      %v2571 = vpack.c.b16 %v2466, %v2465
      %v2572 = vpack.c.b16 %v2468, %v2467
      %v2573 = vpack.c.b16 %v2470, %v2469
      %v2574 = vpack.c.b16 %v2472, %v2471
      %v2575 = vpack.c.b16 %v2474, %v2473
      %v2576 = vpack.c.b16 %v2476, %v2475
      %v2577 = vpack.c.b16 %v2478, %v2477
      %v2578 = vpack.c.b16 %v2480, %v2479
      %v2579 = vpack.c.b16 %v2482, %v2481
      %v2580 = vpack.c.b16 %v2484, %v2483
      %v2581 = vpack.c.b16 %v2486, %v2485
      %v2582 = vpack.c.b16 %v2488, %v2487
      %v2583 = vpack.c.b16 %v2490, %v2489
      %v2584 = vpack.c.b16 %v2492, %v2491
      %v2585 = vpack.c.b16 %v2494, %v2493
      %v2586 = vpack.c.b16 %v2496, %v2495
      %v2587 = vpack.c.b16 %v2498, %v2497
      %v2588 = vpack.c.b16 %v2500, %v2499
      %v2589 = vpack.c.b16 %v2502, %v2501
      %v2590 = vpack.c.b16 %v2504, %v2503
      %v2591 = vpack.c.b16 %v2506, %v2505
      %v2592 = vpack.c.b16 %v2508, %v2507
      %v2593 = vpack.c.b16 %v2510, %v2509
      %v2594 = vpack.c.b16 %v2512, %v2511
      %v2595 = vpack.c.b16 %v2514, %v2513
      %v2596 = vpack.c.b16 %v2516, %v2515
      %v2597 = vpack.c.b16 %v2518, %v2517
      %v2598 = vpack.c.b16 %v2520, %v2519
      %v2599 = vpack.c.b16 %v2522, %v2521
      %v2600 = vpack.c.b16 %v2524, %v2523
      %v2601 = vpack.c.b16 %v2526, %v2525
      %v2602 = vpack.c.b16 %v2528, %v2527
      %v2603 = vpack.c.b16 %v2530, %v2529
      %v2604 = vpack.c.b16 %v2532, %v2531
      %2677 = vmatprep.subr.bf16.mxu0 0
      %2678 = vmatpush1.bf16.msra.mxu0 %v2540
      %2679 = vmatprep.subr.bf16.mxu0 0
      %2680 = vmatpush1.bf16.msra.mxu0 %v2539
      %2681 = vmatprep.subr.bf16.mxu0 0
      %2682 = vmatpush1.bf16.msra.mxu0 %v2538
      %2683 = vmatprep.subr.bf16.mxu0 0
      %2684 = vmatpush1.bf16.msra.mxu0 %v2537
      %2685 = vmatprep.subr.bf16.mxu0 0
      %2686 = vmatpush1.bf16.msra.mxu0 %v2536
      %2687 = vmatprep.subr.bf16.mxu0 0
      %2688 = vmatpush1.bf16.msra.mxu0 %v2535
      %2689 = vmatprep.subr.bf16.mxu0 0
      %2690 = vmatpush1.bf16.msra.mxu0 %v2534
      %2691 = vmatprep.subr.bf16.mxu0 0
      %2692 = vmatpush1.bf16.msra.mxu0 %v2533
      %2693 = vmatprep.subr.bf16.mxu0 0
      %2694 = vmatpush2.bf16.msra.mxu0 %v2548
      %2695 = vmatprep.subr.bf16.mxu0 0
      %2696 = vmatpush2.bf16.msra.mxu0 %v2547
      %2697 = vmatprep.subr.bf16.mxu0 0
      %2698 = vmatpush2.bf16.msra.mxu0 %v2546
      %2699 = vmatprep.subr.bf16.mxu0 0
      %2700 = vmatpush2.bf16.msra.mxu0 %v2545
      %2701 = vmatprep.subr.bf16.mxu0 0
      %2702 = vmatpush2.bf16.msra.mxu0 %v2544
      %2703 = vmatprep.subr.bf16.mxu0 0
      %2704 = vmatpush2.bf16.msra.mxu0 %v2543
      %2705 = vmatprep.subr.bf16.mxu0 0
      %2706 = vmatpush2.bf16.msra.mxu0 %v2542
      %2707 = vmatprep.subr.bf16.mxu0 0
      %2708 = vmatpush2.bf16.msra.mxu0 %v2541
      %2709 = vmatprep.mubr.bf16.mxu0 %v2102
      %2710 = vmatmul.mubr.bf16.gmra.mxu0 %v2101
      %v2711 = vpop.f32.mrf.mxu0
      %v2712 = vadd.f32 0.0, %v2711
      %v2713 = vpop.f32.mrf.mxu0
      %v2714 = vpop.f32.mrf.mxu0
      %v2715 = vadd.f32 0.0, %v2714
      %v2716 = vpop.f32.mrf.mxu0
      %2717 = vmatprep.mubr.bf16.mxu0 %v2111
      %2718 = vmatmul.mubr.bf16.gmra.mxu0 %v2110
      %v2719 = vpop.f32.mrf.mxu0
      %v2720 = vadd.f32 0.0, %v2719
      %v2721 = vpop.f32.mrf.mxu0
      %v2722 = vpop.f32.mrf.mxu0
      %v2723 = vadd.f32 0.0, %v2722
      %v2724 = vpop.f32.mrf.mxu0
      %2725 = vmatprep.mubr.bf16.mxu0 %v2120
      %2726 = vmatmul.mubr.bf16.gmra.mxu0 %v2119
      %v2727 = vpop.f32.mrf.mxu0
      %v2728 = vadd.f32 0.0, %v2727
      %v2729 = vpop.f32.mrf.mxu0
      %v2730 = vpop.f32.mrf.mxu0
      %v2731 = vadd.f32 0.0, %v2730
      %v2732 = vpop.f32.mrf.mxu0
      %2733 = vmatprep.mubr.bf16.mxu0 %v2129
      %2734 = vmatmul.mubr.bf16.gmra.mxu0 %v2128
      %v2735 = vpop.f32.mrf.mxu0
      %v2736 = vadd.f32 0.0, %v2735
      %v2737 = vpop.f32.mrf.mxu0
      %v2738 = vpop.f32.mrf.mxu0
      %v2739 = vadd.f32 0.0, %v2738
      %v2740 = vpop.f32.mrf.mxu0
      %2741 = vmatprep.mubr.bf16.mxu0 %v2138
      %2742 = vmatmul.mubr.bf16.gmra.mxu0 %v2137
      %v2743 = vpop.f32.mrf.mxu0
      %v2744 = vadd.f32 0.0, %v2743
      %v2745 = vpop.f32.mrf.mxu0
      %v2746 = vpop.f32.mrf.mxu0
      %v2747 = vadd.f32 0.0, %v2746
      %v2748 = vpop.f32.mrf.mxu0
      %2749 = vmatprep.mubr.bf16.mxu0 %v2147
      %2750 = vmatmul.mubr.bf16.gmra.mxu0 %v2146
      %v2751 = vpop.f32.mrf.mxu0
      %v2752 = vadd.f32 0.0, %v2751
      %v2753 = vpop.f32.mrf.mxu0
      %v2754 = vpop.f32.mrf.mxu0
      %v2755 = vadd.f32 0.0, %v2754
      %v2756 = vpop.f32.mrf.mxu0
      %2757 = vmatprep.mubr.bf16.mxu0 %v2156
      %2758 = vmatmul.mubr.bf16.gmra.mxu0 %v2155
      %v2759 = vpop.f32.mrf.mxu0
      %v2760 = vadd.f32 0.0, %v2759
      %v2761 = vpop.f32.mrf.mxu0
      %v2762 = vpop.f32.mrf.mxu0
      %v2763 = vadd.f32 0.0, %v2762
      %v2764 = vpop.f32.mrf.mxu0
      %2765 = vmatprep.mubr.bf16.mxu0 %v2165
      %2766 = vmatmul.mubr.bf16.gmra.mxu0 %v2164
      %v2767 = vpop.f32.mrf.mxu0
      %v2768 = vadd.f32 0.0, %v2767
      %v2769 = vpop.f32.mrf.mxu0
      %v2770 = vpop.f32.mrf.mxu0
      %v2771 = vadd.f32 0.0, %v2770
      %v2772 = vpop.f32.mrf.mxu0
      %2773 = vdwg.mxu0
      %2774 = vmatprep.subr.bf16.mxu0 0
      %2775 = vmatpush1.bf16.msra.mxu0 %v2556
      %2776 = vmatprep.subr.bf16.mxu0 0
      %2777 = vmatpush1.bf16.msra.mxu0 %v2555
      %2778 = vmatprep.subr.bf16.mxu0 0
      %2779 = vmatpush1.bf16.msra.mxu0 %v2554
      %2780 = vmatprep.subr.bf16.mxu0 0
      %2781 = vmatpush1.bf16.msra.mxu0 %v2553
      %2782 = vmatprep.subr.bf16.mxu0 0
      %2783 = vmatpush1.bf16.msra.mxu0 %v2552
      %2784 = vmatprep.subr.bf16.mxu0 0
      %2785 = vmatpush1.bf16.msra.mxu0 %v2551
      %2786 = vmatprep.subr.bf16.mxu0 0
      %2787 = vmatpush1.bf16.msra.mxu0 %v2550
      %2788 = vmatprep.subr.bf16.mxu0 0
      %2789 = vmatpush1.bf16.msra.mxu0 %v2549
      %2790 = vmatprep.subr.bf16.mxu0 0
      %2791 = vmatpush2.bf16.msra.mxu0 %v2564
      %2792 = vmatprep.subr.bf16.mxu0 0
      %2793 = vmatpush2.bf16.msra.mxu0 %v2563
      %2794 = vmatprep.subr.bf16.mxu0 0
      %2795 = vmatpush2.bf16.msra.mxu0 %v2562
      %2796 = vmatprep.subr.bf16.mxu0 0
      %2797 = vmatpush2.bf16.msra.mxu0 %v2561
      %2798 = vmatprep.subr.bf16.mxu0 0
      %2799 = vmatpush2.bf16.msra.mxu0 %v2560
      %2800 = vmatprep.subr.bf16.mxu0 0
      %2801 = vmatpush2.bf16.msra.mxu0 %v2559
      %2802 = vmatprep.subr.bf16.mxu0 0
      %2803 = vmatpush2.bf16.msra.mxu0 %v2558
      %2804 = vmatprep.subr.bf16.mxu0 0
      %2805 = vmatpush2.bf16.msra.mxu0 %v2557
      %2806 = vmatprep.mubr.bf16.mxu0 %v2104
      %2807 = vmatmul.mubr.bf16.gmra.mxu0 %v2103
      %v2808 = vpop.f32.mrf.mxu0
      %v2809 = vadd.f32 %v2712, %v2808
      %v2810 = vpop.f32.mrf.mxu0
      %v2811 = vpop.f32.mrf.mxu0
      %v2812 = vadd.f32 %v2715, %v2811
      %v2813 = vpop.f32.mrf.mxu0
      %2814 = vmatprep.mubr.bf16.mxu0 %v2113
      %2815 = vmatmul.mubr.bf16.gmra.mxu0 %v2112
      %v2816 = vpop.f32.mrf.mxu0
      %v2817 = vadd.f32 %v2720, %v2816
      %v2818 = vpop.f32.mrf.mxu0
      %v2819 = vpop.f32.mrf.mxu0
      %v2820 = vadd.f32 %v2723, %v2819
      %v2821 = vpop.f32.mrf.mxu0
      %2822 = vmatprep.mubr.bf16.mxu0 %v2122
      %2823 = vmatmul.mubr.bf16.gmra.mxu0 %v2121
      %v2824 = vpop.f32.mrf.mxu0
      %v2825 = vadd.f32 %v2728, %v2824
      %v2826 = vpop.f32.mrf.mxu0
      %v2827 = vpop.f32.mrf.mxu0
      %v2828 = vadd.f32 %v2731, %v2827
      %v2829 = vpop.f32.mrf.mxu0
      %2830 = vmatprep.mubr.bf16.mxu0 %v2131
      %2831 = vmatmul.mubr.bf16.gmra.mxu0 %v2130
      %v2832 = vpop.f32.mrf.mxu0
      %v2833 = vadd.f32 %v2736, %v2832
      %v2834 = vpop.f32.mrf.mxu0
      %v2835 = vpop.f32.mrf.mxu0
      %v2836 = vadd.f32 %v2739, %v2835
      %v2837 = vpop.f32.mrf.mxu0
      %2838 = vmatprep.mubr.bf16.mxu0 %v2140
      %2839 = vmatmul.mubr.bf16.gmra.mxu0 %v2139
      %v2840 = vpop.f32.mrf.mxu0
      %v2841 = vadd.f32 %v2744, %v2840
      %v2842 = vpop.f32.mrf.mxu0
      %v2843 = vpop.f32.mrf.mxu0
      %v2844 = vadd.f32 %v2747, %v2843
      %v2845 = vpop.f32.mrf.mxu0
      %2846 = vmatprep.mubr.bf16.mxu0 %v2149
      %2847 = vmatmul.mubr.bf16.gmra.mxu0 %v2148
      %v2848 = vpop.f32.mrf.mxu0
      %v2849 = vadd.f32 %v2752, %v2848
      %v2850 = vpop.f32.mrf.mxu0
      %v2851 = vpop.f32.mrf.mxu0
      %v2852 = vadd.f32 %v2755, %v2851
      %v2853 = vpop.f32.mrf.mxu0
      %2854 = vmatprep.mubr.bf16.mxu0 %v2158
      %2855 = vmatmul.mubr.bf16.gmra.mxu0 %v2157
      %v2856 = vpop.f32.mrf.mxu0
      %v2857 = vadd.f32 %v2760, %v2856
      %v2858 = vpop.f32.mrf.mxu0
      %v2859 = vpop.f32.mrf.mxu0
      %v2860 = vadd.f32 %v2763, %v2859
      %v2861 = vpop.f32.mrf.mxu0
      %2862 = vmatprep.mubr.bf16.mxu0 %v2167
      %2863 = vmatmul.mubr.bf16.gmra.mxu0 %v2166
      %v2864 = vpop.f32.mrf.mxu0
      %v2865 = vadd.f32 %v2768, %v2864
      %v2866 = vpop.f32.mrf.mxu0
      %v2867 = vpop.f32.mrf.mxu0
      %v2868 = vadd.f32 %v2771, %v2867
      %v2869 = vpop.f32.mrf.mxu0
      %2870 = vdwg.mxu0
      %2871 = vmatprep.subr.bf16.mxu0 0
      %2872 = vmatpush1.bf16.msra.mxu0 %v2572
      %2873 = vmatprep.subr.bf16.mxu0 0
      %2874 = vmatpush1.bf16.msra.mxu0 %v2571
      %2875 = vmatprep.subr.bf16.mxu0 0
      %2876 = vmatpush1.bf16.msra.mxu0 %v2570
      %2877 = vmatprep.subr.bf16.mxu0 0
      %2878 = vmatpush1.bf16.msra.mxu0 %v2569
      %2879 = vmatprep.subr.bf16.mxu0 0
      %2880 = vmatpush1.bf16.msra.mxu0 %v2568
      %2881 = vmatprep.subr.bf16.mxu0 0
      %2882 = vmatpush1.bf16.msra.mxu0 %v2567
      %2883 = vmatprep.subr.bf16.mxu0 0
      %2884 = vmatpush1.bf16.msra.mxu0 %v2566
      %2885 = vmatprep.subr.bf16.mxu0 0
      %2886 = vmatpush1.bf16.msra.mxu0 %v2565
      %2887 = vmatprep.subr.bf16.mxu0 0
      %2888 = vmatpush2.bf16.msra.mxu0 %v2580
      %2889 = vmatprep.subr.bf16.mxu0 0
      %2890 = vmatpush2.bf16.msra.mxu0 %v2579
      %2891 = vmatprep.subr.bf16.mxu0 0
      %2892 = vmatpush2.bf16.msra.mxu0 %v2578
      %2893 = vmatprep.subr.bf16.mxu0 0
      %2894 = vmatpush2.bf16.msra.mxu0 %v2577
      %2895 = vmatprep.subr.bf16.mxu0 0
      %2896 = vmatpush2.bf16.msra.mxu0 %v2576
      %2897 = vmatprep.subr.bf16.mxu0 0
      %2898 = vmatpush2.bf16.msra.mxu0 %v2575
      %2899 = vmatprep.subr.bf16.mxu0 0
      %2900 = vmatpush2.bf16.msra.mxu0 %v2574
      %2901 = vmatprep.subr.bf16.mxu0 0
      %2902 = vmatpush2.bf16.msra.mxu0 %v2573
      %2903 = vmatprep.mubr.bf16.mxu0 %v2106
      %2904 = vmatmul.mubr.bf16.gmra.mxu0 %v2105
      %v2905 = vpop.f32.mrf.mxu0
      %v2906 = vadd.f32 %v2809, %v2905
      %v2907 = vpop.f32.mrf.mxu0
      %v2908 = vpop.f32.mrf.mxu0
      %v2909 = vadd.f32 %v2812, %v2908
      %v2910 = vpop.f32.mrf.mxu0
      %2911 = vmatprep.mubr.bf16.mxu0 %v2115
      %2912 = vmatmul.mubr.bf16.gmra.mxu0 %v2114
      %v2913 = vpop.f32.mrf.mxu0
      %v2914 = vadd.f32 %v2817, %v2913
      %v2915 = vpop.f32.mrf.mxu0
      %v2916 = vpop.f32.mrf.mxu0
      %v2917 = vadd.f32 %v2820, %v2916
      %v2918 = vpop.f32.mrf.mxu0
      %2919 = vmatprep.mubr.bf16.mxu0 %v2124
      %2920 = vmatmul.mubr.bf16.gmra.mxu0 %v2123
      %v2921 = vpop.f32.mrf.mxu0
      %v2922 = vadd.f32 %v2825, %v2921
      %v2923 = vpop.f32.mrf.mxu0
      %v2924 = vpop.f32.mrf.mxu0
      %v2925 = vadd.f32 %v2828, %v2924
      %v2926 = vpop.f32.mrf.mxu0
      %2927 = vmatprep.mubr.bf16.mxu0 %v2133
      %2928 = vmatmul.mubr.bf16.gmra.mxu0 %v2132
      %v2929 = vpop.f32.mrf.mxu0
      %v2930 = vadd.f32 %v2833, %v2929
      %v2931 = vpop.f32.mrf.mxu0
      %v2932 = vpop.f32.mrf.mxu0
      %v2933 = vadd.f32 %v2836, %v2932
      %v2934 = vpop.f32.mrf.mxu0
      %2935 = vmatprep.mubr.bf16.mxu0 %v2142
      %2936 = vmatmul.mubr.bf16.gmra.mxu0 %v2141
      %v2937 = vpop.f32.mrf.mxu0
      %v2938 = vadd.f32 %v2841, %v2937
      %v2939 = vpop.f32.mrf.mxu0
      %v2940 = vpop.f32.mrf.mxu0
      %v2941 = vadd.f32 %v2844, %v2940
      %v2942 = vpop.f32.mrf.mxu0
      %2943 = vmatprep.mubr.bf16.mxu0 %v2151
      %2944 = vmatmul.mubr.bf16.gmra.mxu0 %v2150
      %v2945 = vpop.f32.mrf.mxu0
      %v2946 = vadd.f32 %v2849, %v2945
      %v2947 = vpop.f32.mrf.mxu0
      %v2948 = vpop.f32.mrf.mxu0
      %v2949 = vadd.f32 %v2852, %v2948
      %v2950 = vpop.f32.mrf.mxu0
      %2951 = vmatprep.mubr.bf16.mxu0 %v2160
      %2952 = vmatmul.mubr.bf16.gmra.mxu0 %v2159
      %v2953 = vpop.f32.mrf.mxu0
      %v2954 = vadd.f32 %v2857, %v2953
      %v2955 = vpop.f32.mrf.mxu0
      %v2956 = vpop.f32.mrf.mxu0
      %v2957 = vadd.f32 %v2860, %v2956
      %v2958 = vpop.f32.mrf.mxu0
      %2959 = vmatprep.mubr.bf16.mxu0 %v2169
      %2960 = vmatmul.mubr.bf16.gmra.mxu0 %v2168
      %v2961 = vpop.f32.mrf.mxu0
      %v2962 = vadd.f32 %v2865, %v2961
      %v2963 = vpop.f32.mrf.mxu0
      %v2964 = vpop.f32.mrf.mxu0
      %v2965 = vadd.f32 %v2868, %v2964
      %v2966 = vpop.f32.mrf.mxu0
      %2967 = vdwg.mxu0
      %2968 = vmatprep.subr.bf16.mxu0 0
      %2969 = vmatpush1.bf16.msra.mxu0 %v2588
      %2970 = vmatprep.subr.bf16.mxu0 0
      %2971 = vmatpush1.bf16.msra.mxu0 %v2587
      %2972 = vmatprep.subr.bf16.mxu0 0
      %2973 = vmatpush1.bf16.msra.mxu0 %v2586
      %2974 = vmatprep.subr.bf16.mxu0 0
      %2975 = vmatpush1.bf16.msra.mxu0 %v2585
      %2976 = vmatprep.subr.bf16.mxu0 0
      %2977 = vmatpush1.bf16.msra.mxu0 %v2584
      %2978 = vmatprep.subr.bf16.mxu0 0
      %2979 = vmatpush1.bf16.msra.mxu0 %v2583
      %2980 = vmatprep.subr.bf16.mxu0 0
      %2981 = vmatpush1.bf16.msra.mxu0 %v2582
      %2982 = vmatprep.subr.bf16.mxu0 0
      %2983 = vmatpush1.bf16.msra.mxu0 %v2581
      %2984 = vmatprep.subr.bf16.mxu0 0
      %2985 = vmatpush2.bf16.msra.mxu0 %v2596
      %2986 = vmatprep.subr.bf16.mxu0 0
      %2987 = vmatpush2.bf16.msra.mxu0 %v2595
      %2988 = vmatprep.subr.bf16.mxu0 0
      %2989 = vmatpush2.bf16.msra.mxu0 %v2594
      %2990 = vmatprep.subr.bf16.mxu0 0
      %2991 = vmatpush2.bf16.msra.mxu0 %v2593
      %2992 = vmatprep.subr.bf16.mxu0 0
      %2993 = vmatpush2.bf16.msra.mxu0 %v2592
      %2994 = vmatprep.subr.bf16.mxu0 0
      %2995 = vmatpush2.bf16.msra.mxu0 %v2591
      %2996 = vmatprep.subr.bf16.mxu0 0
      %2997 = vmatpush2.bf16.msra.mxu0 %v2590
      %2998 = vmatprep.subr.bf16.mxu0 0
      %2999 = vmatpush2.bf16.msra.mxu0 %v2589
      %3000 = vmatprep.mubr.bf16.mxu0 %v2108
      %3001 = vmatmul.mubr.bf16.gmra.mxu0 %v2107
      %v3002 = vpop.f32.mrf.mxu0
      %v3003 = vadd.f32 %v2906, %v3002
      %v3004 = vpop.f32.mrf.mxu0
      %v3005 = vpop.f32.mrf.mxu0
      %v3006 = vadd.f32 %v2909, %v3005
      %v3007 = vpop.f32.mrf.mxu0
      %3008 = vmatprep.mubr.bf16.mxu0 %v2117
      %3009 = vmatmul.mubr.bf16.gmra.mxu0 %v2116
      %v3010 = vpop.f32.mrf.mxu0
      %v3011 = vadd.f32 %v2914, %v3010
      %v3012 = vpop.f32.mrf.mxu0
      %v3013 = vpop.f32.mrf.mxu0
      %v3014 = vadd.f32 %v2917, %v3013
      %v3015 = vpop.f32.mrf.mxu0
      %3016 = vmatprep.mubr.bf16.mxu0 %v2126
      %3017 = vmatmul.mubr.bf16.gmra.mxu0 %v2125
      %v3018 = vpop.f32.mrf.mxu0
      %v3019 = vadd.f32 %v2922, %v3018
      %v3020 = vpop.f32.mrf.mxu0
      %v3021 = vpop.f32.mrf.mxu0
      %v3022 = vadd.f32 %v2925, %v3021
      %v3023 = vpop.f32.mrf.mxu0
      %3024 = vmatprep.mubr.bf16.mxu0 %v2135
      %3025 = vmatmul.mubr.bf16.gmra.mxu0 %v2134
      %v3026 = vpop.f32.mrf.mxu0
      %v3027 = vadd.f32 %v2930, %v3026
      %v3028 = vpop.f32.mrf.mxu0
      %v3029 = vpop.f32.mrf.mxu0
      %v3030 = vadd.f32 %v2933, %v3029
      %v3031 = vpop.f32.mrf.mxu0
      %3032 = vmatprep.mubr.bf16.mxu0 %v2144
      %3033 = vmatmul.mubr.bf16.gmra.mxu0 %v2143
      %v3034 = vpop.f32.mrf.mxu0
      %v3035 = vadd.f32 %v2938, %v3034
      %v3036 = vpop.f32.mrf.mxu0
      %v3037 = vpop.f32.mrf.mxu0
      %v3038 = vadd.f32 %v2941, %v3037
      %v3039 = vpop.f32.mrf.mxu0
      %3040 = vmatprep.mubr.bf16.mxu0 %v2153
      %3041 = vmatmul.mubr.bf16.gmra.mxu0 %v2152
      %v3042 = vpop.f32.mrf.mxu0
      %v3043 = vadd.f32 %v2946, %v3042
      %v3044 = vpop.f32.mrf.mxu0
      %v3045 = vpop.f32.mrf.mxu0
      %v3046 = vadd.f32 %v2949, %v3045
      %v3047 = vpop.f32.mrf.mxu0
      %3048 = vmatprep.mubr.bf16.mxu0 %v2162
      %3049 = vmatmul.mubr.bf16.gmra.mxu0 %v2161
      %v3050 = vpop.f32.mrf.mxu0
      %v3051 = vadd.f32 %v2954, %v3050
      %v3052 = vpop.f32.mrf.mxu0
      %v3053 = vpop.f32.mrf.mxu0
      %v3054 = vadd.f32 %v2957, %v3053
      %v3055 = vpop.f32.mrf.mxu0
      %3056 = vmatprep.mubr.bf16.mxu0 %v2171
      %3057 = vmatmul.mubr.bf16.gmra.mxu0 %v2170
      %v3058 = vpop.f32.mrf.mxu0
      %v3059 = vadd.f32 %v2962, %v3058
      %v3060 = vpop.f32.mrf.mxu0
      %v3061 = vpop.f32.mrf.mxu0
      %v3062 = vadd.f32 %v2965, %v3061
      %v3063 = vpop.f32.mrf.mxu0
      %3064 = vdwg.mxu0
      %3065 = vmatprep.subr.bf16.mxu0 0
      %3066 = vmatpush1.bf16.msra.mxu0 %v2604
      %3067 = vmatprep.subr.bf16.mxu0 0
      %3068 = vmatpush1.bf16.msra.mxu0 %v2603
      %3069 = vmatprep.subr.bf16.mxu0 0
      %3070 = vmatpush1.bf16.msra.mxu0 %v2602
      %3071 = vmatprep.subr.bf16.mxu0 0
      %3072 = vmatpush1.bf16.msra.mxu0 %v2601
      %3073 = vmatprep.subr.bf16.mxu0 0
      %3074 = vmatpush1.bf16.msra.mxu0 %v2600
      %3075 = vmatprep.subr.bf16.mxu0 0
      %3076 = vmatpush1.bf16.msra.mxu0 %v2599
      %3077 = vmatprep.subr.bf16.mxu0 0
      %3078 = vmatpush1.bf16.msra.mxu0 %v2598
      %3079 = vmatprep.subr.bf16.mxu0 0
      %3080 = vmatpush1.bf16.msra.mxu0 %v2597
      %3081 = vmatprep.subr.bf16.mxu0 0
      %3082 = vmatpush2.bf16.msra.mxu0 0
      %3083 = vmatprep.subr.bf16.mxu0 0
      %3084 = vmatpush2.bf16.msra.mxu0 0
      %3085 = vmatprep.subr.bf16.mxu0 0
      %3086 = vmatpush2.bf16.msra.mxu0 0
      %3087 = vmatprep.subr.bf16.mxu0 0
      %3088 = vmatpush2.bf16.msra.mxu0 0
      %3089 = vmatprep.subr.bf16.mxu0 0
      %3090 = vmatpush2.bf16.msra.mxu0 0
      %3091 = vmatprep.subr.bf16.mxu0 0
      %3092 = vmatpush2.bf16.msra.mxu0 0
      %3093 = vmatprep.subr.bf16.mxu0 0
      %3094 = vmatpush2.bf16.msra.mxu0 0
      %3095 = vmatprep.subr.bf16.mxu0 0
      %3096 = vmatpush2.bf16.msra.mxu0 0
      %3097 = vmatprep.mubr.bf16.mxu0 0
      %3098 = vmatmul.mubr.bf16.gmra.mxu0 %v2109
      %v3099 = vpop.f32.mrf.mxu0
      %v3100 = vadd.f32 %v3003, %v3099
      %v3101 = vpop.f32.mrf.mxu0
      %v3102 = vpop.f32.mrf.mxu0
      %v3103 = vadd.f32 %v3006, %v3102
      %v3104 = vpop.f32.mrf.mxu0
      %3105 = vmatprep.mubr.bf16.mxu0 0
      %3106 = vmatmul.mubr.bf16.gmra.mxu0 %v2118
      %v3107 = vpop.f32.mrf.mxu0
      %v3108 = vadd.f32 %v3011, %v3107
      %v3109 = vpop.f32.mrf.mxu0
      %v3110 = vpop.f32.mrf.mxu0
      %v3111 = vadd.f32 %v3014, %v3110
      %v3112 = vpop.f32.mrf.mxu0
      %3113 = vmatprep.mubr.bf16.mxu0 0
      %3114 = vmatmul.mubr.bf16.gmra.mxu0 %v2127
      %v3115 = vpop.f32.mrf.mxu0
      %v3116 = vadd.f32 %v3019, %v3115
      %v3117 = vpop.f32.mrf.mxu0
      %v3118 = vpop.f32.mrf.mxu0
      %v3119 = vadd.f32 %v3022, %v3118
      %v3120 = vpop.f32.mrf.mxu0
      %3121 = vmatprep.mubr.bf16.mxu0 0
      %3122 = vmatmul.mubr.bf16.gmra.mxu0 %v2136
      %v3123 = vpop.f32.mrf.mxu0
      %v3124 = vadd.f32 %v3027, %v3123
      %v3125 = vpop.f32.mrf.mxu0
      %v3126 = vpop.f32.mrf.mxu0
      %v3127 = vadd.f32 %v3030, %v3126
      %v3128 = vpop.f32.mrf.mxu0
      %3129 = vmatprep.mubr.bf16.mxu0 0
      %3130 = vmatmul.mubr.bf16.gmra.mxu0 %v2145
      %v3131 = vpop.f32.mrf.mxu0
      %v3132 = vadd.f32 %v3035, %v3131
      %v3133 = vpop.f32.mrf.mxu0
      %v3134 = vpop.f32.mrf.mxu0
      %v3135 = vadd.f32 %v3038, %v3134
      %v3136 = vpop.f32.mrf.mxu0
      %3137 = vmatprep.mubr.bf16.mxu0 0
      %3138 = vmatmul.mubr.bf16.gmra.mxu0 %v2154
      %v3139 = vpop.f32.mrf.mxu0
      %v3140 = vadd.f32 %v3043, %v3139
      %v3141 = vpop.f32.mrf.mxu0
      %v3142 = vpop.f32.mrf.mxu0
      %v3143 = vadd.f32 %v3046, %v3142
      %v3144 = vpop.f32.mrf.mxu0
      %3145 = vmatprep.mubr.bf16.mxu0 0
      %3146 = vmatmul.mubr.bf16.gmra.mxu0 %v2163
      %v3147 = vpop.f32.mrf.mxu0
      %v3148 = vadd.f32 %v3051, %v3147
      %v3149 = vpop.f32.mrf.mxu0
      %v3150 = vpop.f32.mrf.mxu0
      %v3151 = vadd.f32 %v3054, %v3150
      %v3152 = vpop.f32.mrf.mxu0
      %3153 = vmatprep.mubr.bf16.mxu0 0
      %3154 = vmatmul.mubr.bf16.gmra.mxu0 %v2172
      %v3155 = vpop.f32.mrf.mxu0
      %v3156 = vadd.f32 %v3059, %v3155
      %v3157 = vpop.f32.mrf.mxu0
      %v3158 = vpop.f32.mrf.mxu0
      %v3159 = vadd.f32 %v3062, %v3158
      %v3160 = vpop.f32.mrf.mxu0
      %3161 = vdwg.mxu0
      %v3162 = vld [vmem:[%s4] sm:$0x1]
      %vm3163 = vcmp.ge.f32.partialorder %v3100, 0.0
      %vm3164 = vcmp.ge.f32.partialorder %v3103, 0.0
      %vm3165 = vcmp.ge.f32.partialorder %v3108, 0.0
      %vm3166 = vcmp.ge.f32.partialorder %v3111, 0.0
      %vm3167 = vcmp.ge.f32.partialorder %v3116, 0.0
      %vm3168 = vcmp.ge.f32.partialorder %v3119, 0.0
      %vm3169 = vcmp.ge.f32.partialorder %v3124, 0.0
      %vm3170 = vcmp.ge.f32.partialorder %v3127, 0.0
      %vm3171 = vcmp.ge.f32.partialorder %v3132, 0.0
      %vm3172 = vcmp.ge.f32.partialorder %v3135, 0.0
      %vm3173 = vcmp.ge.f32.partialorder %v3140, 0.0
      %vm3174 = vcmp.ge.f32.partialorder %v3143, 0.0
      %vm3175 = vcmp.ge.f32.partialorder %v3148, 0.0
      %vm3176 = vcmp.ge.f32.partialorder %v3151, 0.0
      %vm3177 = vcmp.ge.f32.partialorder %v3156, 0.0
      %vm3178 = vcmp.ge.f32.partialorder %v3159, 0.0
      %v3180 = vlaneseq
      %v3181 = vshrl.u32 %v3180, 7
      %v3182 = vsub.s32 0, %v3181
      %v3183 = vrot.slane %v3162, %v3182
      %v3185 = vmul.f32 %v3100, %v3183
      %v3186 = vmul.f32 %v3103, %v3183
      %v3187 = vmul.f32 %v3108, %v3183
      %v3188 = vmul.f32 %v3111, %v3183
      %v3189 = vmul.f32 %v3116, %v3183
      %v3190 = vmul.f32 %v3119, %v3183
      %v3191 = vmul.f32 %v3124, %v3183
      %v3192 = vmul.f32 %v3127, %v3183
      %v3193 = vmul.f32 %v3132, %v3183
      %v3194 = vmul.f32 %v3135, %v3183
      %v3195 = vmul.f32 %v3140, %v3183
      %v3196 = vmul.f32 %v3143, %v3183
      %v3197 = vmul.f32 %v3148, %v3183
      %v3198 = vmul.f32 %v3151, %v3183
      %v3199 = vmul.f32 %v3156, %v3183
      %v3200 = vmul.f32 %v3159, %v3183
      %v3201 = vsel %vm3163, %v3100, %v3185
      %v3202 = vsel %vm3164, %v3103, %v3186
      %v3203 = vsel %vm3165, %v3108, %v3187
      %v3204 = vsel %vm3166, %v3111, %v3188
      %v3205 = vsel %vm3167, %v3116, %v3189
      %v3206 = vsel %vm3168, %v3119, %v3190
      %v3207 = vsel %vm3169, %v3124, %v3191
      %v3208 = vsel %vm3170, %v3127, %v3192
      %v3209 = vsel %vm3171, %v3132, %v3193
      %v3210 = vsel %vm3172, %v3135, %v3194
      %v3211 = vsel %vm3173, %v3140, %v3195
      %v3212 = vsel %vm3174, %v3143, %v3196
      %v3213 = vsel %vm3175, %v3148, %v3197
      %v3214 = vsel %vm3176, %v3151, %v3198
      %v3215 = vsel %vm3177, %v3156, %v3199
      %v3216 = vsel %vm3178, %v3159, %v3200
      %v3217 = vpack.c.bf16 %v3202, %v3201
      %v3218 = vpack.c.bf16 %v3204, %v3203
      %v3219 = vpack.c.bf16 %v3206, %v3205
      %v3220 = vpack.c.bf16 %v3208, %v3207
      %v3221 = vpack.c.bf16 %v3210, %v3209
      %v3222 = vpack.c.bf16 %v3212, %v3211
      %v3223 = vpack.c.bf16 %v3214, %v3213
      %v3224 = vpack.c.bf16 %v3216, %v3215
      %v3233 = vunpack.c.l.b16 %v3217
      %v3234 = vunpack.c.h.b16 %v3217
      %v3235 = vunpack.c.l.b16 %v3218
      %v3236 = vunpack.c.h.b16 %v3218
      %v3237 = vunpack.c.l.b16 %v3219
      %v3238 = vunpack.c.h.b16 %v3219
      %v3239 = vunpack.c.l.b16 %v3220
      %v3240 = vunpack.c.h.b16 %v3220
      %v3241 = vunpack.c.l.b16 %v3221
      %v3242 = vunpack.c.h.b16 %v3221
      %v3243 = vunpack.c.l.b16 %v3222
      %v3244 = vunpack.c.h.b16 %v3222
      %v3245 = vunpack.c.l.b16 %v3223
      %v3246 = vunpack.c.h.b16 %v3223
      %v3247 = vunpack.c.l.b16 %v3224
      %v3248 = vunpack.c.h.b16 %v3224
      %v3249 = vpack.c.b16 %v3233, %v3233
      %v3250 = vpack.c.b16 %v3234, %v3234
      %v3251 = vpack.c.b16 %v3235, %v3235
      %v3252 = vpack.c.b16 %v3236, %v3236
      %v3253 = vpack.c.b16 %v3237, %v3237
      %v3254 = vpack.c.b16 %v3238, %v3238
      %v3255 = vpack.c.b16 %v3239, %v3239
      %v3256 = vpack.c.b16 %v3240, %v3240
      %v3257 = vpack.c.b16 %v3241, %v3241
      %v3258 = vpack.c.b16 %v3242, %v3242
      %v3259 = vpack.c.b16 %v3243, %v3243
      %v3260 = vpack.c.b16 %v3244, %v3244
      %v3261 = vpack.c.b16 %v3245, %v3245
      %v3262 = vpack.c.b16 %v3246, %v3246
      %v3263 = vpack.c.b16 %v3247, %v3247
      %v3264 = vpack.c.b16 %v3248, %v3248
      %3281 = vst [vmem:[%s391] sm:$0xf] %v3249
      %3282 = vst [vmem:[%s391 + $0x4] sm:$0xf] %v3250
      %3283 = vst [vmem:[%s391 + $0x8] sm:$0xf] %v3251
      %3284 = vst [vmem:[%s391 + $0xc] sm:$0xf] %v3252
      %3285 = vst [vmem:[%s391 + $0x10] sm:$0xf] %v3253
      %3286 = vst [vmem:[%s391 + $0x14] sm:$0xf] %v3254
      %3287 = vst [vmem:[%s391 + $0x18] sm:$0xf] %v3255
      %3288 = vst [vmem:[%s391 + $0x1c] sm:$0xf] %v3256
      %3289 = vst [vmem:[%s391 + $0x20] sm:$0xf] %v3257
      %3290 = vst [vmem:[%s391 + $0x24] sm:$0xf] %v3258
      %3291 = vst [vmem:[%s391 + $0x28] sm:$0xf] %v3259
      %3292 = vst [vmem:[%s391 + $0x2c] sm:$0xf] %v3260
      %3293 = vst [vmem:[%s391 + $0x30] sm:$0xf] %v3261
      %3294 = vst [vmem:[%s391 + $0x34] sm:$0xf] %v3262
      %3295 = vst [vmem:[%s391 + $0x38] sm:$0xf] %v3263
      %3296 = vst [vmem:[%s391 + $0x3c] sm:$0xf] %v3264
      %s3297 = smul.u32 8, %s21
      %p3298 = scmp.lt.s32.totalorder %s20, 1
      %s3299 = scalar_select %p3298, %s20, 1
      %p3300 = scmp.lt.s32.totalorder %s3297, 15
      %s3301 = scalar_select %p3300, %s3297, 15
      %s3302 = smul.addr %s3301, 2
      %s3303 = smul.addr %s3299, 32
      %s3304 = sadd.s32 %s3302, %s3303
      %s3305 = smul.addr %s3304, 4
      %s3306 = scalar_lea.vmem %s5, %s3305
      // Predicated region
      $region41: #{upsample_block.1} parent=39 // pred_check
        %p3307 = pneg %p190
      $region42: #{upsample_block.1} parent=39 // pred_check_branch
        %3309 = sbr.rel (%p3307) target = $region44
      $region43: #{upsample_block.1} parent=39 // pred_region
        %s3310 = smul.u32 8, %s21
      $region44: #{upsample_block.1} parent=39 // pred_fallthru
        _
    $region40: #{upsample_block.1} parent=5 // pred_fallthru
      _
    %p3311 = scmp.le.s32.totalorder 2, %s11
    // Predicated region
    $region45: #{upsample_block.1} parent=5 // pred_check
      %p3312 = pneg %p3311
    $region46: #{upsample_block.1} parent=5 // pred_check_branch
      %3314 = sbr.rel (%p3312) target = $region48
    $region47: #{upsample_block.1} parent=5 // pred_region
      %s3315 = ssub.s32 %s11, 2
      // Predicated region
      $region49: #{upsample_block.1} parent=47 // pred_check
        %p3316 = pneg %p196
      $region50: #{upsample_block.1} parent=47 // pred_check_branch
        %3318 = sbr.rel (%p3316) target = $region52
      $region51: #{upsample_block.1} parent=47 // pred_region
        %s3319 = smul.u32 8, %s23
        %p3320 = scmp.lt.s32.totalorder %s22, 1
        %s3321 = scalar_select %p3320, %s22, 1
        %p3322 = scmp.lt.s32.totalorder %s3319, 15
        %s3323 = scalar_select %p3322, %s3319, 15
        %s3324 = smul.addr %s3323, 2
        %s3325 = smul.addr %s3321, 32
        %s3326 = sadd.s32 %s3324, %s3325
        %s3327 = smul.addr %s3326, 4
        %s3328 = scalar_lea.vmem %s5, %s3327
      $region52: #{upsample_block.1} parent=47 // pred_fallthru
        _
    $region48: #{upsample_block.1} parent=5 // pred_fallthru
      _
  $region6: #{upsample_block.1} parent=0 // loop_footer
    %s15 = sadd.s32 1, %s11
  $region7: #{upsample_block.1} parent=0 // loop_footer_branch
    %10 = sbr.rel target = $region3
  $region8: #{upsample_block.1} parent=0 // loop_exit
    _

</llo_original>
